<compile_context>
chip_gen: v7x
topology: tpu7x:2x2x1
jax: 0.10.0
libtpu: 0.0.40
codegen_flags: <defaults>
</compile_context>

<pallas_src>
from functools import partial

import numpy as np
import jax
import jax.numpy as jnp
from jax.experimental import pallas as pl
from jax.experimental.pallas import tpu as pltpu


def _predict_head_kernel(x_ref, w1_ref, t1_ref, w2_ref, t2_ref,
                         wh_ref, bh_ref, o_ref):
    # x_ref: (Bt, C, N) bf16 features for this batch tile.
    # o_ref: (Bt, N, Dpad) f32 fused-head scores (Dpad % 128 == 0).
    Bt, C, N = x_ref.shape

    # Concatenate the Bt batch slices along the lane axis -> (C, Bt*N) so the
    # MXU sees one wide moving operand per weight-stationary pass.
    if Bt == 1:
        xw = x_ref[0]                                                  # (C, N)
    else:
        xw = jnp.concatenate([x_ref[b] for b in range(Bt)], axis=-1)   # (C, Bt*N)

    # layer 1: conv1x1 (BN scale folded into weight) -> shift -> relu
    h1 = jnp.dot(w1_ref[...], xw, preferred_element_type=jnp.float32)
    h1 = jnp.maximum(h1 + t1_ref[...], 0.0)                            # f32

    # layer 2
    h2 = jnp.dot(w2_ref[...], h1.astype(jnp.bfloat16),
                 preferred_element_type=jnp.float32)
    h2 = jnp.maximum(h2 + t2_ref[...], 0.0)                            # f32

    # fused prediction heads -> (Dpad, Bt*N)
    out = jnp.dot(wh_ref[...], h2.astype(jnp.bfloat16),
                  preferred_element_type=jnp.float32)
    out = out + bh_ref[...]

    # In-kernel XLU transpose; lane dim of the store is Dpad (multiple of 128)
    # so every store is unmasked, and the wrapper needs no output transpose.
    out_t = out.T                                                       # (Bt*N, Dpad)
    for b in range(Bt):
        o_ref[b] = out_t[b * N:(b + 1) * N, :].astype(o_ref.dtype)


def _run_pallas_backbone(features, w1, t1, w2, t2, wh, bh, n_tiles):
    B, C, N = features.shape
    Dpad = wh.shape[0]

    Bt = -(-B // n_tiles)          # batch elements folded into one grid step
    Bpad = Bt * n_tiles

    # bf16 features: halves the dominant HBM->VMEM DMA and removes the
    # in-kernel VPU pack.  Zero-pad batch if it does not split evenly.
    x = features.astype(jnp.bfloat16)
    if Bpad != B:
        x = jnp.pad(x, ((0, Bpad - B), (0, 0), (0, 0)))

    const = lambda i: (0, 0)
    out = pl.pallas_call(
        _predict_head_kernel,
        out_shape=jax.ShapeDtypeStruct((Bpad, N, Dpad), jnp.float32),
        grid=(n_tiles,),
        in_specs=[
            pl.BlockSpec((Bt, C, N), lambda i: (i, 0, 0)),   # features (bf16)
            pl.BlockSpec((C, C), const),                     # W1' (bf16, BN folded)
            pl.BlockSpec((C, 1), const),                     # shift1 (f32)
            pl.BlockSpec((C, C), const),                     # W2' (bf16, BN folded)
            pl.BlockSpec((C, 1), const),                     # shift2 (f32)
            pl.BlockSpec((Dpad, C), const),                  # fused head weights (bf16)
            pl.BlockSpec((Dpad, 1), const),                  # fused head bias (f32)
        ],
        out_specs=pl.BlockSpec((Bt, N, Dpad), lambda i: (i, 0, 0)),
        compiler_params=pltpu.CompilerParams(
            dimension_semantics=("parallel",)),
    )(x, w1, t1, w2, t2, wh, bh)
    return out[:B]                                           # (B, N, Dpad)


@partial(jax.jit, static_argnames=("n_tiles",))
def _forward_scores(features, params, n_tiles):
    p = params
    return _run_pallas_backbone(features, p['w1'], p['t1'], p['w2'], p['t2'],
                                p['wh'], p['bh'], n_tiles)


class ClsAgnosticPredictHeadPallas:
    """JAX/Pallas port of ClsAgnosticPredictHead (eval-mode BatchNorm)."""

    def __init__(self, num_class, num_heading_bin, num_proposal,
                 seed_feat_dim=256, key=None):
        self.num_class = num_class
        self.num_heading_bin = num_heading_bin
        self.num_proposal = num_proposal
        self.seed_feat_dim = seed_feat_dim
        C = seed_feat_dim
        if key is None:
            key = jax.random.PRNGKey(0)
        ks = jax.random.split(key, 16)

        def init_conv(kw, kb, out_ch, in_ch):
            # PyTorch Conv1d default init: U(-1/sqrt(in_ch), 1/sqrt(in_ch))
            bound = 1.0 / np.sqrt(in_ch)
            w = jax.random.uniform(kw, (out_ch, in_ch), jnp.float32, -bound, bound)
            b = jax.random.uniform(kb, (out_ch,), jnp.float32, -bound, bound)
            return w, b

        w1, cb1 = init_conv(ks[0], ks[1], C, C)
        w2, cb2 = init_conv(ks[2], ks[3], C, C)
        w_obj, b_obj = init_conv(ks[4], ks[5], 1, C)
        w_ctr, b_ctr = init_conv(ks[6], ks[7], 3, C)
        w_hcl, b_hcl = init_conv(ks[8], ks[9], num_heading_bin, C)
        w_hrs, b_hrs = init_conv(ks[10], ks[11], num_heading_bin, C)
        w_sz, b_sz = init_conv(ks[12], ks[13], 3, C)
        w_sem, b_sem = init_conv(ks[14], ks[15], num_class, C)

        # Eval-mode BatchNorm1d parameters (deterministic, non-trivial).
        eps = 1e-5
        idx = jnp.arange(C, dtype=jnp.float32)
        g1, beta1 = 1.0 + 0.1 * jnp.cos(idx), 0.05 * jnp.sin(idx)
        mu1, var1 = 0.01 * idx / C, 1.0 + 0.1 * (idx / C)
        g2, beta2 = 1.0 - 0.05 * jnp.sin(idx), 0.02 * jnp.cos(idx)
        mu2, var2 = -0.01 * idx / C, 1.0 + 0.05 * (idx / C)

        # Fold conv bias + BN into per-output-channel scale/shift, then fold
        # the scale into the conv weight so the kernel only does add+relu:
        #   y = (s*W) @ x + t
        s1 = g1 / jnp.sqrt(var1 + eps)
        t1 = beta1 + s1 * (cb1 - mu1)
        s2 = g2 / jnp.sqrt(var2 + eps)
        t2 = beta2 + s2 * (cb2 - mu2)
        w1f = s1[:, None] * w1
        w2f = s2[:, None] * w2

        # Fused prediction heads: concat along output-channel axis in a fixed
        # order, zero-pad rows to a multiple of 128 so the transposed store in
        # the kernel is lane-dense (no masked stores, no wrapper transpose).
        wh = jnp.concatenate([w_obj, w_ctr, w_hcl, w_hrs, w_sz, w_sem], axis=0)  # (Dout, C)
        bh = jnp.concatenate([b_obj, b_ctr, b_hcl, b_hrs, b_sz, b_sem], axis=0)  # (Dout,)
        Dout = wh.shape[0]
        Dpad = -(-Dout // 128) * 128
        wh = jnp.pad(wh, ((0, Dpad - Dout), (0, 0)))
        bh = jnp.pad(bh, ((0, Dpad - Dout),))

        self._head_dim = Dout
        self._splits = np.cumsum(
            [1, 3, num_heading_bin, num_heading_bin, 3]).tolist()

        self.params = dict(
            w1=w1f.astype(jnp.bfloat16), t1=t1.reshape(C, 1).astype(jnp.float32),
            w2=w2f.astype(jnp.bfloat16), t2=t2.reshape(C, 1).astype(jnp.float32),
            wh=wh.astype(jnp.bfloat16), bh=bh.reshape(Dpad, 1).astype(jnp.float32),
        )

    def __call__(self, features, base_xyz, end_points, prefix=''):
        """
        Args:
            features: (B, C, num_proposal)   -- native PyTorch Conv1d layout
            base_xyz: (B, num_proposal, 3)
        Returns:
            (center, pred_size)
        """
        B = features.shape[0]
        N = features.shape[-1]
        NH = self.num_heading_bin

        # At most 2 grid tiles: fills both v7x TensorCores; on v5e/v6e it costs
        # at most one extra ~0.35us step while each tile folds ceil(B/2) batch
        # elements into a wide (C, Bt*N) MXU operand.
        n_tiles = 2 if B >= 2 else 1

        scores_pad = _forward_scores(jnp.asarray(features), self.params,
                                     n_tiles)                     # (B, N, Dpad)
        scores = scores_pad[:, :, :self._head_dim]                # (B, N, Dout)

        obj, ctr_res, h_cls, h_res_n, sz, sem = jnp.split(
            scores, self._splits, axis=-1)

        center = base_xyz + ctr_res
        heading_residuals = h_res_n * (np.pi / NH)
        pred_size = sz.reshape(B, N, 3)

        end_points[f'{prefix}base_xyz'] = base_xyz
        end_points[f'{prefix}objectness_scores'] = obj
        end_points[f'{prefix}center'] = center
        end_points[f'{prefix}heading_scores'] = h_cls
        end_points[f'{prefix}heading_residuals_normalized'] = h_res_n
        end_points[f'{prefix}heading_residuals'] = heading_residuals
        end_points[f'{prefix}pred_size'] = pred_size
        end_points[f'{prefix}sem_cls_scores'] = sem
        return center, pred_size


def _reference_forward(head, features, base_xyz):
    """Plain-JAX reference mirroring the kernel numerics (bf16 matmul inputs,
    f32 accumulation, f32 elementwise)."""
    p = head.params
    NH = head.num_heading_bin

    def mm(w_bf16, a_f32):
        # bf16 x bf16 products are exact in f32, so casting up and doing an
        # f32 einsum reproduces the MXU's bf16-input / f32-accumulate math.
        return jnp.einsum('oc,bcn->bon',
                          w_bf16.astype(jnp.float32),
                          a_f32.astype(jnp.bfloat16).astype(jnp.float32))

    x = features.astype(jnp.float32)
    h1 = jnp.maximum(mm(p['w1'], x) + p['t1'][None], 0.0)
    h2 = jnp.maximum(mm(p['w2'], h1) + p['t2'][None], 0.0)
    out = mm(p['wh'], h2) + p['bh'][None]                  # (B, Dpad, N)
    scores = jnp.transpose(out[:, :head._head_dim, :], (0, 2, 1))
    ctr_res = scores[..., 1:4]
    sz = scores[..., 4 + 2 * NH: 7 + 2 * NH]
    return base_xyz + ctr_res, sz


if __name__ == "__main__":
    # Pallas-friendly shapes: C=128 (sublane/lane aligned), N=128 proposals,
    # B=4 so each of the 2 parallel grid tiles folds 2 batch elements
    # (-> 256-column MXU RHS on the two hidden layers).
    num_class, num_heading_bin, num_proposal, seed_feat_dim = 10, 12, 128, 128
    B = 4

    key = jax.random.PRNGKey(0)
    k_feat, k_xyz, k_param = jax.random.split(key, 3)

    features = jax.random.normal(k_feat, (B, seed_feat_dim, num_proposal), jnp.float32)
    base_xyz = jax.random.normal(k_xyz, (B, num_proposal, 3), jnp.float32)

    head = ClsAgnosticPredictHeadPallas(num_class, num_heading_bin,
                                        num_proposal, seed_feat_dim, key=k_param)

    end_points = {}
    center, pred_size = head(features, base_xyz, end_points, prefix='proposal_')
    center = jax.block_until_ready(center)
    pred_size = jax.block_until_ready(pred_size)

    # sanity check against plain-JAX reference
    center_ref, size_ref = _reference_forward(head, features, base_xyz)
    assert center.shape == (B, num_proposal, 3)
    assert pred_size.shape == (B, num_proposal, 3)
    assert end_points['proposal_objectness_scores'].shape == (B, num_proposal, 1)
    assert end_points['proposal_heading_scores'].shape == (B, num_proposal, num_heading_bin)
    assert end_points['proposal_sem_cls_scores'].shape == (B, num_proposal, num_class)
    np.testing.assert_allclose(np.asarray(center), np.asarray(center_ref),
                               rtol=1e-3, atol=1e-3)
    np.testing.assert_allclose(np.asarray(pred_size), np.asarray(size_ref),
                               rtol=1e-3, atol=1e-3)

    print("KERNEL_OK")
</pallas_src>

<mosaic_0001>
module attributes {stable_mosaic.version = 11 : i64} {
  func.func @_predict_head_kernel(%arg0: i32, %arg1: memref<2x128x128xbf16, #tpu.memory_space<vmem>>, %arg2: memref<128x128xbf16, #tpu.memory_space<vmem>>, %arg3: memref<128x1xf32, #tpu.memory_space<vmem>>, %arg4: memref<128x128xbf16, #tpu.memory_space<vmem>>, %arg5: memref<128x1xf32, #tpu.memory_space<vmem>>, %arg6: memref<128x128xbf16, #tpu.memory_space<vmem>>, %arg7: memref<128x1xf32, #tpu.memory_space<vmem>>, %arg8: memref<2x128x128xf32, #tpu.memory_space<vmem>>) attributes {dimension_semantics = [#tpu.dimension_semantics<parallel>], iteration_bounds = array<i64: 2>, scalar_prefetch = 0 : i64, scratch_operands = 0 : i64, tpu.core_type = #tpu.core_type<tc>, window_params = [{transform_indices = @transform_0, window_bounds = array<i64: 2, 128, 128>}, {pipeline_mode = #tpu.pipeline_mode<synchronous>, transform_indices = @transform_1, window_bounds = array<i64: 128, 128>}, {pipeline_mode = #tpu.pipeline_mode<synchronous>, transform_indices = @transform_2, window_bounds = array<i64: 128, 1>}, {pipeline_mode = #tpu.pipeline_mode<synchronous>, transform_indices = @transform_3, window_bounds = array<i64: 128, 128>}, {pipeline_mode = #tpu.pipeline_mode<synchronous>, transform_indices = @transform_4, window_bounds = array<i64: 128, 1>}, {pipeline_mode = #tpu.pipeline_mode<synchronous>, transform_indices = @transform_5, window_bounds = array<i64: 128, 128>}, {pipeline_mode = #tpu.pipeline_mode<synchronous>, transform_indices = @transform_6, window_bounds = array<i64: 128, 1>}, {transform_indices = @transform_7, window_bounds = array<i64: 2, 128, 128>}]} {
    %c0 = arith.constant 0 : index
    %c0_0 = arith.constant 0 : index
    %c0_1 = arith.constant 0 : index
    %0 = vector.load %arg1[%c0, %c0_0, %c0_1] : memref<2x128x128xbf16, #tpu.memory_space<vmem>>, vector<1x128x128xbf16>
    %1 = vector.shape_cast %0 : vector<1x128x128xbf16> to vector<128x128xbf16>
    %c1 = arith.constant 1 : index
    %c0_2 = arith.constant 0 : index
    %c0_3 = arith.constant 0 : index
    %2 = vector.load %arg1[%c1, %c0_2, %c0_3] : memref<2x128x128xbf16, #tpu.memory_space<vmem>>, vector<1x128x128xbf16>
    %3 = vector.shape_cast %2 : vector<1x128x128xbf16> to vector<128x128xbf16>
    %4 = tpu.concatenate %1, %3 in 1 : vector<128x128xbf16>, vector<128x128xbf16> -> vector<128x256xbf16>
    %c0_4 = arith.constant 0 : index
    %c0_5 = arith.constant 0 : index
    %5 = vector.load %arg2[%c0_4, %c0_5] : memref<128x128xbf16, #tpu.memory_space<vmem>>, vector<128x128xbf16>
    %cst = arith.constant dense<0.000000e+00> : vector<128x256xf32>
    %6 = tpu.matmul %5, %4, %cst {dimension_numbers = #tpu.dot_dimension_numbers<[1], [0], [0], [1], [0, 0, 1, 1], [], []>} : vector<128x128xbf16>, vector<128x256xbf16>, vector<128x256xf32> -> vector<128x256xf32>
    %c0_6 = arith.constant 0 : index
    %c0_7 = arith.constant 0 : index
    %7 = vector.load %arg3[%c0_6, %c0_7] : memref<128x1xf32, #tpu.memory_space<vmem>>, vector<128x1xf32>
    %8 = vector.broadcast %7 : vector<128x1xf32> to vector<128x256xf32>
    %9 = arith.addf %6, %8 : vector<128x256xf32>
    %cst_8 = arith.constant 0.000000e+00 : f32
    %10 = vector.broadcast %cst_8 : f32 to vector<128x256xf32>
    %11 = arith.maximumf %9, %10 : vector<128x256xf32>
    %c0_9 = arith.constant 0 : index
    %c0_10 = arith.constant 0 : index
    %12 = vector.load %arg4[%c0_9, %c0_10] : memref<128x128xbf16, #tpu.memory_space<vmem>>, vector<128x128xbf16>
    %13 = arith.truncf %11 : vector<128x256xf32> to vector<128x256xbf16>
    %cst_11 = arith.constant dense<0.000000e+00> : vector<128x256xf32>
    %14 = tpu.matmul %12, %13, %cst_11 {dimension_numbers = #tpu.dot_dimension_numbers<[1], [0], [0], [1], [0, 0, 1, 1], [], []>} : vector<128x128xbf16>, vector<128x256xbf16>, vector<128x256xf32> -> vector<128x256xf32>
    %c0_12 = arith.constant 0 : index
    %c0_13 = arith.constant 0 : index
    %15 = vector.load %arg5[%c0_12, %c0_13] : memref<128x1xf32, #tpu.memory_space<vmem>>, vector<128x1xf32>
    %16 = vector.broadcast %15 : vector<128x1xf32> to vector<128x256xf32>
    %17 = arith.addf %14, %16 : vector<128x256xf32>
    %cst_14 = arith.constant 0.000000e+00 : f32
    %18 = vector.broadcast %cst_14 : f32 to vector<128x256xf32>
    %19 = arith.maximumf %17, %18 : vector<128x256xf32>
    %c0_15 = arith.constant 0 : index
    %c0_16 = arith.constant 0 : index
    %20 = vector.load %arg6[%c0_15, %c0_16] : memref<128x128xbf16, #tpu.memory_space<vmem>>, vector<128x128xbf16>
    %21 = arith.truncf %19 : vector<128x256xf32> to vector<128x256xbf16>
    %cst_17 = arith.constant dense<0.000000e+00> : vector<128x256xf32>
    %22 = tpu.matmul %20, %21, %cst_17 {dimension_numbers = #tpu.dot_dimension_numbers<[1], [0], [0], [1], [0, 0, 1, 1], [], []>} : vector<128x128xbf16>, vector<128x256xbf16>, vector<128x256xf32> -> vector<128x256xf32>
    %c0_18 = arith.constant 0 : index
    %c0_19 = arith.constant 0 : index
    %23 = vector.load %arg7[%c0_18, %c0_19] : memref<128x1xf32, #tpu.memory_space<vmem>>, vector<128x1xf32>
    %24 = vector.broadcast %23 : vector<128x1xf32> to vector<128x256xf32>
    %25 = arith.addf %22, %24 : vector<128x256xf32>
    %26 = tpu.transpose %25, [1, 0] : vector<128x256xf32> -> vector<256x128xf32>
    %27 = vector.extract_strided_slice %26 {offsets = [0, 0], sizes = [128, 128], strides = [1, 1]} : vector<256x128xf32> to vector<128x128xf32>
    %c0_20 = arith.constant 0 : index
    %c0_21 = arith.constant 0 : index
    %c0_22 = arith.constant 0 : index
    %28 = vector.load %arg8[%c0_20, %c0_21, %c0_22] : memref<2x128x128xf32, #tpu.memory_space<vmem>>, vector<1x128x128xf32>
    %29 = vector.shape_cast %28 : vector<1x128x128xf32> to vector<128x128xf32>
    %30 = vector.shape_cast %27 : vector<128x128xf32> to vector<1x128x128xf32>
    tpu.vector_store %arg8[%c0_20, %c0_21, %c0_22], %30 {strides = array<i32>} : memref<2x128x128xf32, #tpu.memory_space<vmem>>, vector<1x128x128xf32>,
    %31 = vector.extract_strided_slice %26 {offsets = [128, 0], sizes = [128, 128], strides = [1, 1]} : vector<256x128xf32> to vector<128x128xf32>
    %c1_23 = arith.constant 1 : index
    %c0_24 = arith.constant 0 : index
    %c0_25 = arith.constant 0 : index
    %32 = vector.load %arg8[%c1_23, %c0_24, %c0_25] : memref<2x128x128xf32, #tpu.memory_space<vmem>>, vector<1x128x128xf32>
    %33 = vector.shape_cast %32 : vector<1x128x128xf32> to vector<128x128xf32>
    %34 = vector.shape_cast %31 : vector<128x128xf32> to vector<1x128x128xf32>
    tpu.vector_store %arg8[%c1_23, %c0_24, %c0_25], %34 {strides = array<i32>} : memref<2x128x128xf32, #tpu.memory_space<vmem>>, vector<1x128x128xf32>,
    return
  }
  func.func @transform_0(%arg0: i32) -> (i32, i32, i32) {
    %c0_i32 = arith.constant 0 : i32
    %c0_i32_0 = arith.constant 0 : i32
    %c0_i32_1 = arith.constant 0 : i32
    return %arg0, %c0_i32, %c0_i32_0 : i32, i32, i32
  }
  func.func @transform_1(%arg0: i32) -> (i32, i32) {
    %c0_i32 = arith.constant 0 : i32
    %c0_i32_0 = arith.constant 0 : i32
    %c0_i32_1 = arith.constant 0 : i32
    return %c0_i32, %c0_i32_0 : i32, i32
  }
  func.func @transform_2(%arg0: i32) -> (i32, i32) {
    %c0_i32 = arith.constant 0 : i32
    %c0_i32_0 = arith.constant 0 : i32
    %c0_i32_1 = arith.constant 0 : i32
    return %c0_i32, %c0_i32_0 : i32, i32
  }
  func.func @transform_3(%arg0: i32) -> (i32, i32) {
    %c0_i32 = arith.constant 0 : i32
    %c0_i32_0 = arith.constant 0 : i32
    %c0_i32_1 = arith.constant 0 : i32
    return %c0_i32, %c0_i32_0 : i32, i32
  }
  func.func @transform_4(%arg0: i32) -> (i32, i32) {
    %c0_i32 = arith.constant 0 : i32
    %c0_i32_0 = arith.constant 0 : i32
    %c0_i32_1 = arith.constant 0 : i32
    return %c0_i32, %c0_i32_0 : i32, i32
  }
  func.func @transform_5(%arg0: i32) -> (i32, i32) {
    %c0_i32 = arith.constant 0 : i32
    %c0_i32_0 = arith.constant 0 : i32
    %c0_i32_1 = arith.constant 0 : i32
    return %c0_i32, %c0_i32_0 : i32, i32
  }
  func.func @transform_6(%arg0: i32) -> (i32, i32) {
    %c0_i32 = arith.constant 0 : i32
    %c0_i32_0 = arith.constant 0 : i32
    %c0_i32_1 = arith.constant 0 : i32
    return %c0_i32, %c0_i32_0 : i32, i32
  }
  func.func @transform_7(%arg0: i32) -> (i32, i32, i32) {
    %c0_i32 = arith.constant 0 : i32
    %c0_i32_0 = arith.constant 0 : i32
    %c0_i32_1 = arith.constant 0 : i32
    return %arg0, %c0_i32, %c0_i32_0 : i32, i32, i32
  }
}

</mosaic_0001>

<llo_original>
// kernel: _forward_scores.1
$region0: #{_forward_scores.1}
  #allocation0 [shape = 'u32[]', space=smem, size = 0x4, offset = 0x4, fixed_abs, tag = 'smem constant byte address 0x4 - core index']
  #allocation1 [shape = 'u32[144,128]{1,0:T(1,128)}', space=vmem, size = 0x12000, scoped, tag = 'internal scratch']
  %s0 = inlined_call_operand.vmem [shape: bf16[4,128,128], index: 0, kind: input, shape index: {}]
  %s1 = inlined_call_operand.vmem [shape: bf16[128,128], index: 1, kind: input, shape index: {}]
  %s2 = inlined_call_operand.vmem [shape: f32[128,1], index: 2, kind: input, shape index: {}]
  %s3 = inlined_call_operand.vmem [shape: bf16[128,128], index: 3, kind: input, shape index: {}]
  %s4 = inlined_call_operand.vmem [shape: f32[128,1], index: 4, kind: input, shape index: {}]
  %s5 = inlined_call_operand.vmem [shape: bf16[128,128], index: 5, kind: input, shape index: {}]
  %s6 = inlined_call_operand.vmem [shape: f32[128,1], index: 6, kind: input, shape index: {}]
  %s7 = inlined_call_operand.hbm [shape: f32[4,128,128], index: 7, kind: output, shape index: {}]
  %s8 = sld [smem:[#allocation0]]
  $region61: #{_forward_scores.1} parent=0
    _
  %s10 = ssub.s32 1, %s8
  %s11 = scalar_select 0, %s10, %s8
  $region1: #{_forward_scores.1} parent=0
    #allocation2 [shape = 'u8[262144]{0}', space=vmem, size = 0x40000, scoped, tag = 'output window, operand 0']
    #allocation3 [shape = 's32[2]{0}', space=sflag, size = 0x8, scoped, tag = 'scoped memory for _forward_scores.1']
    %12 = vsyncpa [#allocation3], 0
    %s13 = scalar_lea.sflag [#allocation3], 1
    %14 = vsyncpa %s13, 0
    loop: start=0, step=1, limit=4
    $region2: #{_forward_scores.1} parent=1 // loop_pre_header
      _
    $region3: #{_forward_scores.1} parent=1 // loop_header
      %s16 = sphi 0, %s20
      %p17 = scmp.ge.s32.totalorder %s16, 4
      %s26 = sphi 0, %s28
      %s29 = sphi 0, %s26
      %s30 = sphi 0, %s29
      %s46 = sphi 0, %s30
      %s50 = sphi 0, %s50
      %s52 = sphi 0, %s50
      %s53 = sphi 0, %s52
      %s67 = sphi 0, %s53
      %s71 = sphi 0, %s71
      %s73 = sphi 0, %s71
      %s74 = sphi 0, %s73
      %s88 = sphi 0, %s74
      %s92 = sphi 0, %s92
      %s94 = sphi 0, %s92
      %s95 = sphi 0, %s94
      %s109 = sphi 0, %s95
      %s113 = sphi 0, %s113
      %s115 = sphi 0, %s113
      %s116 = sphi 0, %s115
      %s130 = sphi 0, %s116
      %s134 = sphi 0, %s134
      %s136 = sphi 0, %s134
      %s137 = sphi 0, %s136
      %s151 = sphi 0, %s137
      %s155 = sphi 0, %s155
      %s157 = sphi 0, %s155
      %s158 = sphi 0, %s157
      %s172 = sphi 0, %s158
      %s178 = sphi 0, %s180
      %s181 = sphi 0, %s178
      %s182 = sphi 0, %s181
      %s198 = sphi 0, %s182
    $region4: #{_forward_scores.1} parent=1 // loop_header_branch
      %19 = sbr.rel (%p17) target = $region8
    $region5: #{_forward_scores.1} parent=1 // loop_body
      %s21 = ssub.s32 %s16, 1
      %s22 = ssub.s32 %s16, 2
      %s23 = sadd.s32 %s16, 1
      %s24 = ssub.s32 %s16, %s23
      %p25 = scmp.eq.s32.totalorder %s24, 0
      %s27 = sadd.s32 %s26, 1
      %s28 = scalar_select %p25, %s26, %s27
      %p31 = pneg %p25
      %p32 = scmp.eq.s32.totalorder %s16, 1
      %p33 = por %p31, %p32
      %p34 = scmp.ne.s32.totalorder %s26, %s29
      %p35 = scmp.eq.s32.totalorder %s16, 0
      %p36 = por %p34, %p35
      %p37 = scmp.ne.s32.totalorder %s26, %s29
      %p38 = scmp.eq.s32.totalorder %s21, 1
      %p39 = por %p37, %p38
      %p40 = scmp.ne.s32.totalorder %s29, %s30
      %p41 = scmp.eq.s32.totalorder %s21, 0
      %p42 = por %p40, %p41
      %p43 = scmp.ne.s32.totalorder %s29, %s30
      %p44 = scmp.eq.s32.totalorder %s22, 1
      %p45 = por %p43, %p44
      %p47 = scmp.ne.s32.totalorder %s30, %s46
      %p48 = scmp.eq.s32.totalorder %s22, 0
      %p49 = por %p47, %p48
      %s51 = sadd.s32 %s50, 1
      %p54 = scmp.eq.s32.totalorder %s16, 1
      %p55 = scmp.ne.s32.totalorder %s50, %s52
      %p56 = scmp.eq.s32.totalorder %s16, 0
      %p57 = por %p55, %p56
      %p58 = scmp.ne.s32.totalorder %s50, %s52
      %p59 = scmp.eq.s32.totalorder %s21, 1
      %p60 = por %p58, %p59
      %p61 = scmp.ne.s32.totalorder %s52, %s53
      %p62 = scmp.eq.s32.totalorder %s21, 0
      %p63 = por %p61, %p62
      %p64 = scmp.ne.s32.totalorder %s52, %s53
      %p65 = scmp.eq.s32.totalorder %s22, 1
      %p66 = por %p64, %p65
      %p68 = scmp.ne.s32.totalorder %s53, %s67
      %p69 = scmp.eq.s32.totalorder %s22, 0
      %p70 = por %p68, %p69
      %s72 = sadd.s32 %s71, 1
      %p75 = scmp.eq.s32.totalorder %s16, 1
      %p76 = scmp.ne.s32.totalorder %s71, %s73
      %p77 = scmp.eq.s32.totalorder %s16, 0
      %p78 = por %p76, %p77
      %p79 = scmp.ne.s32.totalorder %s71, %s73
      %p80 = scmp.eq.s32.totalorder %s21, 1
      %p81 = por %p79, %p80
      %p82 = scmp.ne.s32.totalorder %s73, %s74
      %p83 = scmp.eq.s32.totalorder %s21, 0
      %p84 = por %p82, %p83
      %p85 = scmp.ne.s32.totalorder %s73, %s74
      %p86 = scmp.eq.s32.totalorder %s22, 1
      %p87 = por %p85, %p86
      %p89 = scmp.ne.s32.totalorder %s74, %s88
      %p90 = scmp.eq.s32.totalorder %s22, 0
      %p91 = por %p89, %p90
      %s93 = sadd.s32 %s92, 1
      %p96 = scmp.eq.s32.totalorder %s16, 1
      %p97 = scmp.ne.s32.totalorder %s92, %s94
      %p98 = scmp.eq.s32.totalorder %s16, 0
      %p99 = por %p97, %p98
      %p100 = scmp.ne.s32.totalorder %s92, %s94
      %p101 = scmp.eq.s32.totalorder %s21, 1
      %p102 = por %p100, %p101
      %p103 = scmp.ne.s32.totalorder %s94, %s95
      %p104 = scmp.eq.s32.totalorder %s21, 0
      %p105 = por %p103, %p104
      %p106 = scmp.ne.s32.totalorder %s94, %s95
      %p107 = scmp.eq.s32.totalorder %s22, 1
      %p108 = por %p106, %p107
      %p110 = scmp.ne.s32.totalorder %s95, %s109
      %p111 = scmp.eq.s32.totalorder %s22, 0
      %p112 = por %p110, %p111
      %s114 = sadd.s32 %s113, 1
      %p117 = scmp.eq.s32.totalorder %s16, 1
      %p118 = scmp.ne.s32.totalorder %s113, %s115
      %p119 = scmp.eq.s32.totalorder %s16, 0
      %p120 = por %p118, %p119
      %p121 = scmp.ne.s32.totalorder %s113, %s115
      %p122 = scmp.eq.s32.totalorder %s21, 1
      %p123 = por %p121, %p122
      %p124 = scmp.ne.s32.totalorder %s115, %s116
      %p125 = scmp.eq.s32.totalorder %s21, 0
      %p126 = por %p124, %p125
      %p127 = scmp.ne.s32.totalorder %s115, %s116
      %p128 = scmp.eq.s32.totalorder %s22, 1
      %p129 = por %p127, %p128
      %p131 = scmp.ne.s32.totalorder %s116, %s130
      %p132 = scmp.eq.s32.totalorder %s22, 0
      %p133 = por %p131, %p132
      %s135 = sadd.s32 %s134, 1
      %p138 = scmp.eq.s32.totalorder %s16, 1
      %p139 = scmp.ne.s32.totalorder %s134, %s136
      %p140 = scmp.eq.s32.totalorder %s16, 0
      %p141 = por %p139, %p140
      %p142 = scmp.ne.s32.totalorder %s134, %s136
      %p143 = scmp.eq.s32.totalorder %s21, 1
      %p144 = por %p142, %p143
      %p145 = scmp.ne.s32.totalorder %s136, %s137
      %p146 = scmp.eq.s32.totalorder %s21, 0
      %p147 = por %p145, %p146
      %p148 = scmp.ne.s32.totalorder %s136, %s137
      %p149 = scmp.eq.s32.totalorder %s22, 1
      %p150 = por %p148, %p149
      %p152 = scmp.ne.s32.totalorder %s137, %s151
      %p153 = scmp.eq.s32.totalorder %s22, 0
      %p154 = por %p152, %p153
      %s156 = sadd.s32 %s155, 1
      %p159 = scmp.eq.s32.totalorder %s16, 1
      %p160 = scmp.ne.s32.totalorder %s155, %s157
      %p161 = scmp.eq.s32.totalorder %s16, 0
      %p162 = por %p160, %p161
      %p163 = scmp.ne.s32.totalorder %s155, %s157
      %p164 = scmp.eq.s32.totalorder %s21, 1
      %p165 = por %p163, %p164
      %p166 = scmp.ne.s32.totalorder %s157, %s158
      %p167 = scmp.eq.s32.totalorder %s21, 0
      %p168 = por %p166, %p167
      %p169 = scmp.ne.s32.totalorder %s157, %s158
      %p170 = scmp.eq.s32.totalorder %s22, 1
      %p171 = por %p169, %p170
      %p173 = scmp.ne.s32.totalorder %s158, %s172
      %p174 = scmp.eq.s32.totalorder %s22, 0
      %p175 = por %p173, %p174
      %s176 = ssub.s32 %s16, %s23
      %p177 = scmp.eq.s32.totalorder %s176, 0
      %s179 = sadd.s32 %s178, 1
      %s180 = scalar_select %p177, %s178, %s179
      %p183 = pneg %p177
      %p184 = scmp.eq.s32.totalorder %s16, 1
      %p185 = por %p183, %p184
      %p186 = scmp.ne.s32.totalorder %s178, %s181
      %p187 = scmp.eq.s32.totalorder %s16, 0
      %p188 = por %p186, %p187
      %p189 = scmp.ne.s32.totalorder %s178, %s181
      %p190 = scmp.eq.s32.totalorder %s21, 1
      %p191 = por %p189, %p190
      %p192 = scmp.ne.s32.totalorder %s181, %s182
      %p193 = scmp.eq.s32.totalorder %s21, 0
      %p194 = por %p192, %p193
      %p195 = scmp.ne.s32.totalorder %s181, %s182
      %p196 = scmp.eq.s32.totalorder %s22, 1
      %p197 = por %p195, %p196
      %p199 = scmp.ne.s32.totalorder %s182, %s198
      %p200 = scmp.eq.s32.totalorder %s22, 0
      %p201 = por %p199, %p200
      %p202 = scmp.le.s32.totalorder 1, %s16
      %p203 = scmp.lt.s32.totalorder %s16, 3
      %p204 = pnand %p202, %p203
      %p205 = pneg %p204
      // Predicated region
      $region9: #{_forward_scores.1} parent=5 // pred_check
        _
      $region10: #{_forward_scores.1} parent=5 // pred_check_branch
        %207 = sbr.rel (%p204) target = $region12
      $region11: #{_forward_scores.1} parent=5 // pred_region
        %s208 = ssub.s32 %s16, 1
        // Predicated region
        $region13: #{_forward_scores.1} parent=11 // pred_check
          %p209 = pneg %p63
        $region14: #{_forward_scores.1} parent=11 // pred_check_branch
          %211 = sbr.rel (%p209) target = $region16
        $region15: #{_forward_scores.1} parent=11 // pred_region
          _
        $region16: #{_forward_scores.1} parent=11 // pred_fallthru
          _
        // Predicated region
        $region17: #{_forward_scores.1} parent=11 // pred_check
          %p212 = pneg %p84
        $region18: #{_forward_scores.1} parent=11 // pred_check_branch
          %214 = sbr.rel (%p212) target = $region20
        $region19: #{_forward_scores.1} parent=11 // pred_region
          _
        $region20: #{_forward_scores.1} parent=11 // pred_fallthru
          _
        // Predicated region
        $region21: #{_forward_scores.1} parent=11 // pred_check
          %p215 = pneg %p105
        $region22: #{_forward_scores.1} parent=11 // pred_check_branch
          %217 = sbr.rel (%p215) target = $region24
        $region23: #{_forward_scores.1} parent=11 // pred_region
          _
        $region24: #{_forward_scores.1} parent=11 // pred_fallthru
          _
        // Predicated region
        $region25: #{_forward_scores.1} parent=11 // pred_check
          %p218 = pneg %p126
        $region26: #{_forward_scores.1} parent=11 // pred_check_branch
          %220 = sbr.rel (%p218) target = $region28
        $region27: #{_forward_scores.1} parent=11 // pred_region
          _
        $region28: #{_forward_scores.1} parent=11 // pred_fallthru
          _
        // Predicated region
        $region29: #{_forward_scores.1} parent=11 // pred_check
          %p221 = pneg %p147
        $region30: #{_forward_scores.1} parent=11 // pred_check_branch
          %223 = sbr.rel (%p221) target = $region32
        $region31: #{_forward_scores.1} parent=11 // pred_region
          _
        $region32: #{_forward_scores.1} parent=11 // pred_fallthru
          _
        // Predicated region
        $region33: #{_forward_scores.1} parent=11 // pred_check
          %p224 = pneg %p168
        $region34: #{_forward_scores.1} parent=11 // pred_check_branch
          %226 = sbr.rel (%p224) target = $region36
        $region35: #{_forward_scores.1} parent=11 // pred_region
          _
        $region36: #{_forward_scores.1} parent=11 // pred_fallthru
          _
      $region12: #{_forward_scores.1} parent=5 // pred_fallthru
        _
      %p227 = scmp.lt.s32.totalorder %s16, 2
      // Predicated region
      $region37: #{_forward_scores.1} parent=5 // pred_check
        %p228 = pneg %p227
      $region38: #{_forward_scores.1} parent=5 // pred_check_branch
        %230 = sbr.rel (%p228) target = $region40
      $region39: #{_forward_scores.1} parent=5 // pred_region
        // Predicated region
        $region41: #{_forward_scores.1} parent=39 // pred_check
          %p231 = pneg %p36
        $region42: #{_forward_scores.1} parent=39 // pred_check_branch
          %233 = sbr.rel (%p231) target = $region44
        $region43: #{_forward_scores.1} parent=39 // pred_region
          %s234 = smul.u32 2, %s16
          %p235 = scmp.lt.s32.totalorder %s234, 3
          %s236 = scalar_select %p235, %s234, 3
          %s237 = smul.addr %s236, 16
          %s238 = smul.addr %s237, 4
          %s239 = scalar_lea.vmem %s0, %s238
          %s240 = smul.u32 2, %s16
        $region44: #{_forward_scores.1} parent=39 // pred_fallthru
          _
      $region40: #{_forward_scores.1} parent=5 // pred_fallthru
        _
      %p241 = scmp.le.s32.totalorder 1, %s16
      %p242 = scmp.lt.s32.totalorder %s16, 3
      %p243 = pnand %p241, %p242
      %p244 = pneg %p243
      // Predicated region
      $region45: #{_forward_scores.1} parent=5 // pred_check
        _
      $region46: #{_forward_scores.1} parent=5 // pred_check_branch
        %246 = sbr.rel (%p243) target = $region48
      $region47: #{_forward_scores.1} parent=5 // pred_region
        %s247 = ssub.s32 %s16, 1
        %s248 = smul.u32 2, %s21
        %p249 = scmp.lt.s32.totalorder %s248, 3
        %s250 = scalar_select %p249, %s248, 3
        %s251 = smul.addr %s250, 16
        %s252 = smul.addr %s251, 4
        %s253 = scalar_lea.vmem %s0, %s252
        %p254 = pneg %p42
        %p255 = pneg %p39
        %p256 = pneg %p63
        %p257 = pneg %p60
        %p258 = pneg %p84
        %p259 = pneg %p81
        %p260 = pneg %p105
        %p261 = pneg %p102
        %p262 = pneg %p126
        %p263 = pneg %p123
        %p264 = pneg %p147
        %p265 = pneg %p144
        %p266 = pneg %p168
        %p267 = pneg %p165
        %p268 = pneg %p194
        %p269 = pneg %p191
        %s270 = sand.u32 %s181, 1
        %s271 = scalar_lea.sflag [#allocation3], %s270
        %s272 = sand.u32 %s181, 1
        %s273 = smul.addr %s272, 256
        %s274 = scalar_lea.vmem [#allocation2], %s273
        %s275 = smul.u32 2, %s21
        %p276 = scmp.lt.s32.totalorder %s275, 3
        %s277 = scalar_select %p276, %s275, 3
        %s278 = smul.addr %s277, 16
        %s279 = smul.addr %s278, 4
        %s280 = scalar_lea.vmem %s0, %s279
        %s281 = smul.u32 2, %s21
        %s282 = smul.u32 2, %s21
        %v284 = vld [vmem:[%s280] sm:$0xf]
        %v285 = vld [vmem:[%s280 + $0x4] sm:$0xf]
        %v286 = vld [vmem:[%s280 + $0x8] sm:$0xf]
        %v287 = vld [vmem:[%s280 + $0xc] sm:$0xf]
        %v288 = vld [vmem:[%s280 + $0x10] sm:$0xf]
        %v289 = vld [vmem:[%s280 + $0x14] sm:$0xf]
        %v290 = vld [vmem:[%s280 + $0x18] sm:$0xf]
        %v291 = vld [vmem:[%s280 + $0x1c] sm:$0xf]
        %v292 = vld [vmem:[%s280 + $0x20] sm:$0xf]
        %v293 = vld [vmem:[%s280 + $0x24] sm:$0xf]
        %v294 = vld [vmem:[%s280 + $0x28] sm:$0xf]
        %v295 = vld [vmem:[%s280 + $0x2c] sm:$0xf]
        %v296 = vld [vmem:[%s280 + $0x30] sm:$0xf]
        %v297 = vld [vmem:[%s280 + $0x34] sm:$0xf]
        %v298 = vld [vmem:[%s280 + $0x38] sm:$0xf]
        %v299 = vld [vmem:[%s280 + $0x3c] sm:$0xf]
        %s300 = scalar_lea.vmem %s280, 64
        %v301 = vld [vmem:[%s300] sm:$0xf]
        %v302 = vld [vmem:[%s300 + $0x4] sm:$0xf]
        %v303 = vld [vmem:[%s300 + $0x8] sm:$0xf]
        %v304 = vld [vmem:[%s300 + $0xc] sm:$0xf]
        %v305 = vld [vmem:[%s300 + $0x10] sm:$0xf]
        %v306 = vld [vmem:[%s300 + $0x14] sm:$0xf]
        %v307 = vld [vmem:[%s300 + $0x18] sm:$0xf]
        %v308 = vld [vmem:[%s300 + $0x1c] sm:$0xf]
        %v309 = vld [vmem:[%s300 + $0x20] sm:$0xf]
        %v310 = vld [vmem:[%s300 + $0x24] sm:$0xf]
        %v311 = vld [vmem:[%s300 + $0x28] sm:$0xf]
        %v312 = vld [vmem:[%s300 + $0x2c] sm:$0xf]
        %v313 = vld [vmem:[%s300 + $0x30] sm:$0xf]
        %v314 = vld [vmem:[%s300 + $0x34] sm:$0xf]
        %v315 = vld [vmem:[%s300 + $0x38] sm:$0xf]
        %v316 = vld [vmem:[%s300 + $0x3c] sm:$0xf]
        %v333 = vunpack.c.l.b16 %v284
        %v334 = vunpack.c.l.b16 %v285
        %v335 = vunpack.c.l.b16 %v286
        %v336 = vunpack.c.l.b16 %v287
        %v337 = vunpack.c.l.b16 %v288
        %v338 = vunpack.c.l.b16 %v289
        %v339 = vunpack.c.l.b16 %v290
        %v340 = vunpack.c.l.b16 %v291
        %v341 = vunpack.c.l.b16 %v292
        %v342 = vunpack.c.l.b16 %v293
        %v343 = vunpack.c.l.b16 %v294
        %v344 = vunpack.c.l.b16 %v295
        %v345 = vunpack.c.l.b16 %v296
        %v346 = vunpack.c.l.b16 %v297
        %v347 = vunpack.c.l.b16 %v298
        %v348 = vunpack.c.l.b16 %v299
        %v349 = vpack.c.b16 %v334, %v333
        %v350 = vpack.c.b16 %v336, %v335
        %v351 = vpack.c.b16 %v338, %v337
        %v352 = vpack.c.b16 %v340, %v339
        %v353 = vpack.c.b16 %v342, %v341
        %v354 = vpack.c.b16 %v344, %v343
        %v355 = vpack.c.b16 %v346, %v345
        %v356 = vpack.c.b16 %v348, %v347
        %v381 = vunpack.c.l.b16 %v301
        %v382 = vunpack.c.l.b16 %v302
        %v383 = vunpack.c.l.b16 %v303
        %v384 = vunpack.c.l.b16 %v304
        %v385 = vunpack.c.l.b16 %v305
        %v386 = vunpack.c.l.b16 %v306
        %v387 = vunpack.c.l.b16 %v307
        %v388 = vunpack.c.l.b16 %v308
        %v389 = vunpack.c.l.b16 %v309
        %v390 = vunpack.c.l.b16 %v310
        %v391 = vunpack.c.l.b16 %v311
        %v392 = vunpack.c.l.b16 %v312
        %v393 = vunpack.c.l.b16 %v313
        %v394 = vunpack.c.l.b16 %v314
        %v395 = vunpack.c.l.b16 %v315
        %v396 = vunpack.c.l.b16 %v316
        %v397 = vpack.c.b16 %v382, %v381
        %v398 = vpack.c.b16 %v384, %v383
        %v399 = vpack.c.b16 %v386, %v385
        %v400 = vpack.c.b16 %v388, %v387
        %v401 = vpack.c.b16 %v390, %v389
        %v402 = vpack.c.b16 %v392, %v391
        %v403 = vpack.c.b16 %v394, %v393
        %v404 = vpack.c.b16 %v396, %v395
        %v413 = vld [vmem:[%s1] sm:$0xf]
        %v414 = vld [vmem:[%s1 + $0x4] sm:$0xf]
        %v415 = vld [vmem:[%s1 + $0x8] sm:$0xf]
        %v416 = vld [vmem:[%s1 + $0xc] sm:$0xf]
        %v417 = vld [vmem:[%s1 + $0x10] sm:$0xf]
        %v418 = vld [vmem:[%s1 + $0x14] sm:$0xf]
        %v419 = vld [vmem:[%s1 + $0x18] sm:$0xf]
        %v420 = vld [vmem:[%s1 + $0x1c] sm:$0xf]
        %v421 = vld [vmem:[%s1 + $0x20] sm:$0xf]
        %v422 = vld [vmem:[%s1 + $0x24] sm:$0xf]
        %v423 = vld [vmem:[%s1 + $0x28] sm:$0xf]
        %v424 = vld [vmem:[%s1 + $0x2c] sm:$0xf]
        %v425 = vld [vmem:[%s1 + $0x30] sm:$0xf]
        %v426 = vld [vmem:[%s1 + $0x34] sm:$0xf]
        %v427 = vld [vmem:[%s1 + $0x38] sm:$0xf]
        %v428 = vld [vmem:[%s1 + $0x3c] sm:$0xf]
        %v429 = vld [vmem:[%s2] sm:$0xff]
        %v430 = vld [vmem:[%s2 + $0x8] sm:$0xff]
        %v431 = vld [vmem:[%s2 + $0x10] sm:$0xff]
        %v432 = vld [vmem:[%s2 + $0x18] sm:$0xff]
        %v433 = vld [vmem:[%s2 + $0x20] sm:$0xff]
        %v434 = vld [vmem:[%s2 + $0x28] sm:$0xff]
        %v435 = vld [vmem:[%s2 + $0x30] sm:$0xff]
        %v436 = vld [vmem:[%s2 + $0x38] sm:$0xff]
        %v437 = vld [vmem:[%s2 + $0x40] sm:$0xff]
        %v438 = vld [vmem:[%s2 + $0x48] sm:$0xff]
        %v439 = vld [vmem:[%s2 + $0x50] sm:$0xff]
        %v440 = vld [vmem:[%s2 + $0x58] sm:$0xff]
        %v441 = vld [vmem:[%s2 + $0x60] sm:$0xff]
        %v442 = vld [vmem:[%s2 + $0x68] sm:$0xff]
        %v443 = vld [vmem:[%s2 + $0x70] sm:$0xff]
        %v444 = vld [vmem:[%s2 + $0x78] sm:$0xff]
        %446 = vset.pattern.permute.xlu0 0
        %447 = vperm.xlu0 %446, %v429
        %v448 = vpop.permute.xlu0 %447
        %451 = vset.pattern.permute.xlu0 0
        %452 = vperm.xlu0 %451, %v430
        %v453 = vpop.permute.xlu0 %452
        %456 = vset.pattern.permute.xlu0 0
        %457 = vperm.xlu0 %456, %v431
        %v458 = vpop.permute.xlu0 %457
        %461 = vset.pattern.permute.xlu0 0
        %462 = vperm.xlu0 %461, %v432
        %v463 = vpop.permute.xlu0 %462
        %466 = vset.pattern.permute.xlu0 0
        %467 = vperm.xlu0 %466, %v433
        %v468 = vpop.permute.xlu0 %467
        %471 = vset.pattern.permute.xlu0 0
        %472 = vperm.xlu0 %471, %v434
        %v473 = vpop.permute.xlu0 %472
        %476 = vset.pattern.permute.xlu0 0
        %477 = vperm.xlu0 %476, %v435
        %v478 = vpop.permute.xlu0 %477
        %481 = vset.pattern.permute.xlu0 0
        %482 = vperm.xlu0 %481, %v436
        %v483 = vpop.permute.xlu0 %482
        %486 = vset.pattern.permute.xlu0 0
        %487 = vperm.xlu0 %486, %v437
        %v488 = vpop.permute.xlu0 %487
        %491 = vset.pattern.permute.xlu0 0
        %492 = vperm.xlu0 %491, %v438
        %v493 = vpop.permute.xlu0 %492
        %496 = vset.pattern.permute.xlu0 0
        %497 = vperm.xlu0 %496, %v439
        %v498 = vpop.permute.xlu0 %497
        %501 = vset.pattern.permute.xlu0 0
        %502 = vperm.xlu0 %501, %v440
        %v503 = vpop.permute.xlu0 %502
        %506 = vset.pattern.permute.xlu0 0
        %507 = vperm.xlu0 %506, %v441
        %v508 = vpop.permute.xlu0 %507
        %511 = vset.pattern.permute.xlu0 0
        %512 = vperm.xlu0 %511, %v442
        %v513 = vpop.permute.xlu0 %512
        %516 = vset.pattern.permute.xlu0 0
        %517 = vperm.xlu0 %516, %v443
        %v518 = vpop.permute.xlu0 %517
        %521 = vset.pattern.permute.xlu0 0
        %522 = vperm.xlu0 %521, %v444
        %v523 = vpop.permute.xlu0 %522
        %v541 = vunpack.c.l.b16 %v413
        %v542 = vunpack.c.l.b16 %v414
        %v543 = vunpack.c.l.b16 %v415
        %v544 = vunpack.c.l.b16 %v416
        %v545 = vunpack.c.l.b16 %v417
        %v546 = vunpack.c.l.b16 %v418
        %v547 = vunpack.c.l.b16 %v419
        %v548 = vunpack.c.l.b16 %v420
        %v549 = vunpack.c.l.b16 %v421
        %v550 = vunpack.c.l.b16 %v422
        %v551 = vunpack.c.l.b16 %v423
        %v552 = vunpack.c.l.b16 %v424
        %v553 = vunpack.c.l.b16 %v425
        %v554 = vunpack.c.l.b16 %v426
        %v555 = vunpack.c.l.b16 %v427
        %v556 = vunpack.c.l.b16 %v428
        %v557 = vpack.c.b16 %v542, %v541
        %v558 = vpack.c.b16 %v544, %v543
        %v559 = vpack.c.b16 %v546, %v545
        %v560 = vpack.c.b16 %v548, %v547
        %v561 = vpack.c.b16 %v550, %v549
        %v562 = vpack.c.b16 %v552, %v551
        %v563 = vpack.c.b16 %v554, %v553
        %v564 = vpack.c.b16 %v556, %v555
        %573 = vmatprep.subr.bf16.mxu0 %v397
        %574 = vmatpush1.bf16.msra.mxu0 %v349
        %575 = vmatprep.subr.bf16.mxu0 %v398
        %576 = vmatpush1.bf16.msra.mxu0 %v350
        %577 = vmatprep.subr.bf16.mxu0 %v399
        %578 = vmatpush1.bf16.msra.mxu0 %v351
        %579 = vmatprep.subr.bf16.mxu0 %v400
        %580 = vmatpush1.bf16.msra.mxu0 %v352
        %581 = vmatprep.subr.bf16.mxu0 %v401
        %582 = vmatpush1.bf16.msra.mxu0 %v353
        %583 = vmatprep.subr.bf16.mxu0 %v402
        %584 = vmatpush1.bf16.msra.mxu0 %v354
        %585 = vmatprep.subr.bf16.mxu0 %v403
        %586 = vmatpush1.bf16.msra.mxu0 %v355
        %587 = vmatprep.subr.bf16.mxu0 %v404
        %588 = vmatpush1.bf16.msra.mxu0 %v356
        %589 = vmatprep.subr.bf16.mxu0 0
        %590 = vmatpush1.bf16.msra.mxu0 0
        %591 = vmatprep.subr.bf16.mxu0 0
        %592 = vmatpush1.bf16.msra.mxu0 0
        %593 = vmatprep.subr.bf16.mxu0 0
        %594 = vmatpush1.bf16.msra.mxu0 0
        %595 = vmatprep.subr.bf16.mxu0 0
        %596 = vmatpush1.bf16.msra.mxu0 0
        %597 = vmatprep.subr.bf16.mxu0 0
        %598 = vmatpush1.bf16.msra.mxu0 0
        %599 = vmatprep.subr.bf16.mxu0 0
        %600 = vmatpush1.bf16.msra.mxu0 0
        %601 = vmatprep.subr.bf16.mxu0 0
        %602 = vmatpush1.bf16.msra.mxu0 0
        %603 = vmatprep.subr.bf16.mxu0 0
        %604 = vmatpush1.bf16.msra.mxu0 0
        %605 = vmatprep.mubr.bf16.mxu0 0
        %606 = vmatmul.mubr.bf16.gmra.mrb[0].mxu0 %v557
        %v607 = vpop.f32.mrb[0].mxu0
        %v608 = vadd.f32 %v448, %v607
        %v609 = vpop.f32.mrb[0].mxu0
        %v610 = vadd.f32 %v448, %v609
        %v611 = vpop.f32.mrb[0].mxu0
        %v612 = vadd.f32 %v453, %v611
        %v613 = vpop.f32.mrb[0].mxu0
        %v614 = vadd.f32 %v453, %v613
        %615 = vmatprep.mubr.bf16.mxu0 0
        %616 = vmatmul.mubr.bf16.gmra.mrb[0].mxu0 %v558
        %v617 = vpop.f32.mrb[0].mxu0
        %v618 = vadd.f32 %v458, %v617
        %v619 = vpop.f32.mrb[0].mxu0
        %v620 = vadd.f32 %v458, %v619
        %v621 = vpop.f32.mrb[0].mxu0
        %v622 = vadd.f32 %v463, %v621
        %v623 = vpop.f32.mrb[0].mxu0
        %v624 = vadd.f32 %v463, %v623
        %625 = vmatprep.mubr.bf16.mxu0 0
        %626 = vmatmul.mubr.bf16.gmra.mrb[0].mxu0 %v559
        %v627 = vpop.f32.mrb[0].mxu0
        %v628 = vadd.f32 %v468, %v627
        %v629 = vpop.f32.mrb[0].mxu0
        %v630 = vadd.f32 %v468, %v629
        %v631 = vpop.f32.mrb[0].mxu0
        %v632 = vadd.f32 %v473, %v631
        %v633 = vpop.f32.mrb[0].mxu0
        %v634 = vadd.f32 %v473, %v633
        %635 = vmatprep.mubr.bf16.mxu0 0
        %636 = vmatmul.mubr.bf16.gmra.mrb[0].mxu0 %v560
        %v637 = vpop.f32.mrb[0].mxu0
        %v638 = vadd.f32 %v478, %v637
        %v639 = vpop.f32.mrb[0].mxu0
        %v640 = vadd.f32 %v478, %v639
        %v641 = vpop.f32.mrb[0].mxu0
        %v642 = vadd.f32 %v483, %v641
        %v643 = vpop.f32.mrb[0].mxu0
        %v644 = vadd.f32 %v483, %v643
        %645 = vmatprep.mubr.bf16.mxu0 0
        %646 = vmatmul.mubr.bf16.gmra.mrb[0].mxu0 %v561
        %v647 = vpop.f32.mrb[0].mxu0
        %v648 = vadd.f32 %v488, %v647
        %v649 = vpop.f32.mrb[0].mxu0
        %v650 = vadd.f32 %v488, %v649
        %v651 = vpop.f32.mrb[0].mxu0
        %v652 = vadd.f32 %v493, %v651
        %v653 = vpop.f32.mrb[0].mxu0
        %v654 = vadd.f32 %v493, %v653
        %655 = vmatprep.mubr.bf16.mxu0 0
        %656 = vmatmul.mubr.bf16.gmra.mrb[0].mxu0 %v562
        %v657 = vpop.f32.mrb[0].mxu0
        %v658 = vadd.f32 %v498, %v657
        %v659 = vpop.f32.mrb[0].mxu0
        %v660 = vadd.f32 %v498, %v659
        %v661 = vpop.f32.mrb[0].mxu0
        %v662 = vadd.f32 %v503, %v661
        %v663 = vpop.f32.mrb[0].mxu0
        %v664 = vadd.f32 %v503, %v663
        %665 = vmatprep.mubr.bf16.mxu0 0
        %666 = vmatmul.mubr.bf16.gmra.mrb[0].mxu0 %v563
        %v667 = vpop.f32.mrb[0].mxu0
        %v668 = vadd.f32 %v508, %v667
        %v669 = vpop.f32.mrb[0].mxu0
        %v670 = vadd.f32 %v508, %v669
        %v671 = vpop.f32.mrb[0].mxu0
        %v672 = vadd.f32 %v513, %v671
        %v673 = vpop.f32.mrb[0].mxu0
        %v674 = vadd.f32 %v513, %v673
        %675 = vmatprep.mubr.bf16.mxu0 0
        %676 = vmatmul.mubr.bf16.gmra.mrb[0].mxu0 %v564
        %v677 = vpop.f32.mrb[0].mxu0
        %v678 = vadd.f32 %v518, %v677
        %v679 = vpop.f32.mrb[0].mxu0
        %v680 = vadd.f32 %v518, %v679
        %v681 = vpop.f32.mrb[0].mxu0
        %v682 = vadd.f32 %v523, %v681
        %v683 = vpop.f32.mrb[0].mxu0
        %v684 = vadd.f32 %v523, %v683
        %685 = vdwg.mxu0
        %v686 = vmax.f32 %v608, 0.0
        %v687 = vmax.f32 %v610, 0.0
        %v688 = vmax.f32 %v612, 0.0
        %v689 = vmax.f32 %v614, 0.0
        %v690 = vmax.f32 %v618, 0.0
        %v691 = vmax.f32 %v620, 0.0
        %v692 = vmax.f32 %v622, 0.0
        %v693 = vmax.f32 %v624, 0.0
        %v694 = vmax.f32 %v628, 0.0
        %v695 = vmax.f32 %v630, 0.0
        %v696 = vmax.f32 %v632, 0.0
        %v697 = vmax.f32 %v634, 0.0
        %v698 = vmax.f32 %v638, 0.0
        %v699 = vmax.f32 %v640, 0.0
        %v700 = vmax.f32 %v642, 0.0
        %v701 = vmax.f32 %v644, 0.0
        %v702 = vmax.f32 %v648, 0.0
        %v703 = vmax.f32 %v650, 0.0
        %v704 = vmax.f32 %v652, 0.0
        %v705 = vmax.f32 %v654, 0.0
        %v706 = vmax.f32 %v658, 0.0
        %v707 = vmax.f32 %v660, 0.0
        %v708 = vmax.f32 %v662, 0.0
        %v709 = vmax.f32 %v664, 0.0
        %v710 = vmax.f32 %v668, 0.0
        %v711 = vmax.f32 %v670, 0.0
        %v712 = vmax.f32 %v672, 0.0
        %v713 = vmax.f32 %v674, 0.0
        %v714 = vmax.f32 %v678, 0.0
        %v715 = vmax.f32 %v680, 0.0
        %v716 = vmax.f32 %v682, 0.0
        %v717 = vmax.f32 %v684, 0.0
        %v718 = vld [vmem:[%s3] sm:$0xf]
        %v719 = vld [vmem:[%s3 + $0x4] sm:$0xf]
        %v720 = vld [vmem:[%s3 + $0x8] sm:$0xf]
        %v721 = vld [vmem:[%s3 + $0xc] sm:$0xf]
        %v722 = vld [vmem:[%s3 + $0x10] sm:$0xf]
        %v723 = vld [vmem:[%s3 + $0x14] sm:$0xf]
        %v724 = vld [vmem:[%s3 + $0x18] sm:$0xf]
        %v725 = vld [vmem:[%s3 + $0x1c] sm:$0xf]
        %v726 = vld [vmem:[%s3 + $0x20] sm:$0xf]
        %v727 = vld [vmem:[%s3 + $0x24] sm:$0xf]
        %v728 = vld [vmem:[%s3 + $0x28] sm:$0xf]
        %v729 = vld [vmem:[%s3 + $0x2c] sm:$0xf]
        %v730 = vld [vmem:[%s3 + $0x30] sm:$0xf]
        %v731 = vld [vmem:[%s3 + $0x34] sm:$0xf]
        %v732 = vld [vmem:[%s3 + $0x38] sm:$0xf]
        %v733 = vld [vmem:[%s3 + $0x3c] sm:$0xf]
        %v734 = vpack.c.bf16 %v688, %v686
        %v735 = vpack.c.bf16 %v689, %v687
        %v736 = vpack.c.bf16 %v692, %v690
        %v737 = vpack.c.bf16 %v693, %v691
        %v738 = vpack.c.bf16 %v696, %v694
        %v739 = vpack.c.bf16 %v697, %v695
        %v740 = vpack.c.bf16 %v700, %v698
        %v741 = vpack.c.bf16 %v701, %v699
        %v742 = vpack.c.bf16 %v704, %v702
        %v743 = vpack.c.bf16 %v705, %v703
        %v744 = vpack.c.bf16 %v708, %v706
        %v745 = vpack.c.bf16 %v709, %v707
        %v746 = vpack.c.bf16 %v712, %v710
        %v747 = vpack.c.bf16 %v713, %v711
        %v748 = vpack.c.bf16 %v716, %v714
        %v749 = vpack.c.bf16 %v717, %v715
        %v750 = vld [vmem:[%s4] sm:$0xff]
        %v751 = vld [vmem:[%s4 + $0x8] sm:$0xff]
        %v752 = vld [vmem:[%s4 + $0x10] sm:$0xff]
        %v753 = vld [vmem:[%s4 + $0x18] sm:$0xff]
        %v754 = vld [vmem:[%s4 + $0x20] sm:$0xff]
        %v755 = vld [vmem:[%s4 + $0x28] sm:$0xff]
        %v756 = vld [vmem:[%s4 + $0x30] sm:$0xff]
        %v757 = vld [vmem:[%s4 + $0x38] sm:$0xff]
        %v758 = vld [vmem:[%s4 + $0x40] sm:$0xff]
        %v759 = vld [vmem:[%s4 + $0x48] sm:$0xff]
        %v760 = vld [vmem:[%s4 + $0x50] sm:$0xff]
        %v761 = vld [vmem:[%s4 + $0x58] sm:$0xff]
        %v762 = vld [vmem:[%s4 + $0x60] sm:$0xff]
        %v763 = vld [vmem:[%s4 + $0x68] sm:$0xff]
        %v764 = vld [vmem:[%s4 + $0x70] sm:$0xff]
        %v765 = vld [vmem:[%s4 + $0x78] sm:$0xff]
        %767 = vset.pattern.permute.xlu0 0
        %768 = vperm.xlu0 %767, %v750
        %v769 = vpop.permute.xlu0 %768
        %772 = vset.pattern.permute.xlu0 0
        %773 = vperm.xlu0 %772, %v751
        %v774 = vpop.permute.xlu0 %773
        %777 = vset.pattern.permute.xlu0 0
        %778 = vperm.xlu0 %777, %v752
        %v779 = vpop.permute.xlu0 %778
        %782 = vset.pattern.permute.xlu0 0
        %783 = vperm.xlu0 %782, %v753
        %v784 = vpop.permute.xlu0 %783
        %787 = vset.pattern.permute.xlu0 0
        %788 = vperm.xlu0 %787, %v754
        %v789 = vpop.permute.xlu0 %788
        %792 = vset.pattern.permute.xlu0 0
        %793 = vperm.xlu0 %792, %v755
        %v794 = vpop.permute.xlu0 %793
        %797 = vset.pattern.permute.xlu0 0
        %798 = vperm.xlu0 %797, %v756
        %v799 = vpop.permute.xlu0 %798
        %802 = vset.pattern.permute.xlu0 0
        %803 = vperm.xlu0 %802, %v757
        %v804 = vpop.permute.xlu0 %803
        %807 = vset.pattern.permute.xlu0 0
        %808 = vperm.xlu0 %807, %v758
        %v809 = vpop.permute.xlu0 %808
        %812 = vset.pattern.permute.xlu0 0
        %813 = vperm.xlu0 %812, %v759
        %v814 = vpop.permute.xlu0 %813
        %817 = vset.pattern.permute.xlu0 0
        %818 = vperm.xlu0 %817, %v760
        %v819 = vpop.permute.xlu0 %818
        %822 = vset.pattern.permute.xlu0 0
        %823 = vperm.xlu0 %822, %v761
        %v824 = vpop.permute.xlu0 %823
        %827 = vset.pattern.permute.xlu0 0
        %828 = vperm.xlu0 %827, %v762
        %v829 = vpop.permute.xlu0 %828
        %832 = vset.pattern.permute.xlu0 0
        %833 = vperm.xlu0 %832, %v763
        %v834 = vpop.permute.xlu0 %833
        %837 = vset.pattern.permute.xlu0 0
        %838 = vperm.xlu0 %837, %v764
        %v839 = vpop.permute.xlu0 %838
        %842 = vset.pattern.permute.xlu0 0
        %843 = vperm.xlu0 %842, %v765
        %v844 = vpop.permute.xlu0 %843
        %v862 = vunpack.c.l.b16 %v718
        %v863 = vunpack.c.l.b16 %v719
        %v864 = vunpack.c.l.b16 %v720
        %v865 = vunpack.c.l.b16 %v721
        %v866 = vunpack.c.l.b16 %v722
        %v867 = vunpack.c.l.b16 %v723
        %v868 = vunpack.c.l.b16 %v724
        %v869 = vunpack.c.l.b16 %v725
        %v870 = vunpack.c.l.b16 %v726
        %v871 = vunpack.c.l.b16 %v727
        %v872 = vunpack.c.l.b16 %v728
        %v873 = vunpack.c.l.b16 %v729
        %v874 = vunpack.c.l.b16 %v730
        %v875 = vunpack.c.l.b16 %v731
        %v876 = vunpack.c.l.b16 %v732
        %v877 = vunpack.c.l.b16 %v733
        %v878 = vpack.c.b16 %v863, %v862
        %v879 = vpack.c.b16 %v865, %v864
        %v880 = vpack.c.b16 %v867, %v866
        %v881 = vpack.c.b16 %v869, %v868
        %v882 = vpack.c.b16 %v871, %v870
        %v883 = vpack.c.b16 %v873, %v872
        %v884 = vpack.c.b16 %v875, %v874
        %v885 = vpack.c.b16 %v877, %v876
        %894 = vmatprep.subr.bf16.mxu0 %v735
        %895 = vmatpush1.bf16.msra.mxu0 %v734
        %896 = vmatprep.subr.bf16.mxu0 %v737
        %897 = vmatpush1.bf16.msra.mxu0 %v736
        %898 = vmatprep.subr.bf16.mxu0 %v739
        %899 = vmatpush1.bf16.msra.mxu0 %v738
        %900 = vmatprep.subr.bf16.mxu0 %v741
        %901 = vmatpush1.bf16.msra.mxu0 %v740
        %902 = vmatprep.subr.bf16.mxu0 %v743
        %903 = vmatpush1.bf16.msra.mxu0 %v742
        %904 = vmatprep.subr.bf16.mxu0 %v745
        %905 = vmatpush1.bf16.msra.mxu0 %v744
        %906 = vmatprep.subr.bf16.mxu0 %v747
        %907 = vmatpush1.bf16.msra.mxu0 %v746
        %908 = vmatprep.subr.bf16.mxu0 %v749
        %909 = vmatpush1.bf16.msra.mxu0 %v748
        %910 = vmatprep.subr.bf16.mxu0 0
        %911 = vmatpush1.bf16.msra.mxu0 0
        %912 = vmatprep.subr.bf16.mxu0 0
        %913 = vmatpush1.bf16.msra.mxu0 0
        %914 = vmatprep.subr.bf16.mxu0 0
        %915 = vmatpush1.bf16.msra.mxu0 0
        %916 = vmatprep.subr.bf16.mxu0 0
        %917 = vmatpush1.bf16.msra.mxu0 0
        %918 = vmatprep.subr.bf16.mxu0 0
        %919 = vmatpush1.bf16.msra.mxu0 0
        %920 = vmatprep.subr.bf16.mxu0 0
        %921 = vmatpush1.bf16.msra.mxu0 0
        %922 = vmatprep.subr.bf16.mxu0 0
        %923 = vmatpush1.bf16.msra.mxu0 0
        %924 = vmatprep.subr.bf16.mxu0 0
        %925 = vmatpush1.bf16.msra.mxu0 0
        %926 = vmatprep.mubr.bf16.mxu0 0
        %927 = vmatmul.mubr.bf16.gmra.mrb[0].mxu0 %v878
        %v928 = vpop.f32.mrb[0].mxu0
        %v929 = vadd.f32 %v769, %v928
        %v930 = vpop.f32.mrb[0].mxu0
        %v931 = vadd.f32 %v769, %v930
        %v932 = vpop.f32.mrb[0].mxu0
        %v933 = vadd.f32 %v774, %v932
        %v934 = vpop.f32.mrb[0].mxu0
        %v935 = vadd.f32 %v774, %v934
        %936 = vmatprep.mubr.bf16.mxu0 0
        %937 = vmatmul.mubr.bf16.gmra.mrb[0].mxu0 %v879
        %v938 = vpop.f32.mrb[0].mxu0
        %v939 = vadd.f32 %v779, %v938
        %v940 = vpop.f32.mrb[0].mxu0
        %v941 = vadd.f32 %v779, %v940
        %v942 = vpop.f32.mrb[0].mxu0
        %v943 = vadd.f32 %v784, %v942
        %v944 = vpop.f32.mrb[0].mxu0
        %v945 = vadd.f32 %v784, %v944
        %946 = vmatprep.mubr.bf16.mxu0 0
        %947 = vmatmul.mubr.bf16.gmra.mrb[0].mxu0 %v880
        %v948 = vpop.f32.mrb[0].mxu0
        %v949 = vadd.f32 %v789, %v948
        %v950 = vpop.f32.mrb[0].mxu0
        %v951 = vadd.f32 %v789, %v950
        %v952 = vpop.f32.mrb[0].mxu0
        %v953 = vadd.f32 %v794, %v952
        %v954 = vpop.f32.mrb[0].mxu0
        %v955 = vadd.f32 %v794, %v954
        %956 = vmatprep.mubr.bf16.mxu0 0
        %957 = vmatmul.mubr.bf16.gmra.mrb[0].mxu0 %v881
        %v958 = vpop.f32.mrb[0].mxu0
        %v959 = vadd.f32 %v799, %v958
        %v960 = vpop.f32.mrb[0].mxu0
        %v961 = vadd.f32 %v799, %v960
        %v962 = vpop.f32.mrb[0].mxu0
        %v963 = vadd.f32 %v804, %v962
        %v964 = vpop.f32.mrb[0].mxu0
        %v965 = vadd.f32 %v804, %v964
        %966 = vmatprep.mubr.bf16.mxu0 0
        %967 = vmatmul.mubr.bf16.gmra.mrb[0].mxu0 %v882
        %v968 = vpop.f32.mrb[0].mxu0
        %v969 = vadd.f32 %v809, %v968
        %v970 = vpop.f32.mrb[0].mxu0
        %v971 = vadd.f32 %v809, %v970
        %v972 = vpop.f32.mrb[0].mxu0
        %v973 = vadd.f32 %v814, %v972
        %v974 = vpop.f32.mrb[0].mxu0
        %v975 = vadd.f32 %v814, %v974
        %976 = vmatprep.mubr.bf16.mxu0 0
        %977 = vmatmul.mubr.bf16.gmra.mrb[0].mxu0 %v883
        %v978 = vpop.f32.mrb[0].mxu0
        %v979 = vadd.f32 %v819, %v978
        %v980 = vpop.f32.mrb[0].mxu0
        %v981 = vadd.f32 %v819, %v980
        %v982 = vpop.f32.mrb[0].mxu0
        %v983 = vadd.f32 %v824, %v982
        %v984 = vpop.f32.mrb[0].mxu0
        %v985 = vadd.f32 %v824, %v984
        %986 = vmatprep.mubr.bf16.mxu0 0
        %987 = vmatmul.mubr.bf16.gmra.mrb[0].mxu0 %v884
        %v988 = vpop.f32.mrb[0].mxu0
        %v989 = vadd.f32 %v829, %v988
        %v990 = vpop.f32.mrb[0].mxu0
        %v991 = vadd.f32 %v829, %v990
        %v992 = vpop.f32.mrb[0].mxu0
        %v993 = vadd.f32 %v834, %v992
        %v994 = vpop.f32.mrb[0].mxu0
        %v995 = vadd.f32 %v834, %v994
        %996 = vmatprep.mubr.bf16.mxu0 0
        %997 = vmatmul.mubr.bf16.gmra.mrb[0].mxu0 %v885
        %v998 = vpop.f32.mrb[0].mxu0
        %v999 = vadd.f32 %v839, %v998
        %v1000 = vpop.f32.mrb[0].mxu0
        %v1001 = vadd.f32 %v839, %v1000
        %v1002 = vpop.f32.mrb[0].mxu0
        %v1003 = vadd.f32 %v844, %v1002
        %v1004 = vpop.f32.mrb[0].mxu0
        %v1005 = vadd.f32 %v844, %v1004
        %1006 = vdwg.mxu0
        %v1007 = vmax.f32 %v929, 0.0
        %v1008 = vmax.f32 %v931, 0.0
        %v1009 = vmax.f32 %v933, 0.0
        %v1010 = vmax.f32 %v935, 0.0
        %v1011 = vmax.f32 %v939, 0.0
        %v1012 = vmax.f32 %v941, 0.0
        %v1013 = vmax.f32 %v943, 0.0
        %v1014 = vmax.f32 %v945, 0.0
        %v1015 = vmax.f32 %v949, 0.0
        %v1016 = vmax.f32 %v951, 0.0
        %v1017 = vmax.f32 %v953, 0.0
        %v1018 = vmax.f32 %v955, 0.0
        %v1019 = vmax.f32 %v959, 0.0
        %v1020 = vmax.f32 %v961, 0.0
        %v1021 = vmax.f32 %v963, 0.0
        %v1022 = vmax.f32 %v965, 0.0
        %v1023 = vmax.f32 %v969, 0.0
        %v1024 = vmax.f32 %v971, 0.0
        %v1025 = vmax.f32 %v973, 0.0
        %v1026 = vmax.f32 %v975, 0.0
        %v1027 = vmax.f32 %v979, 0.0
        %v1028 = vmax.f32 %v981, 0.0
        %v1029 = vmax.f32 %v983, 0.0
        %v1030 = vmax.f32 %v985, 0.0
        %v1031 = vmax.f32 %v989, 0.0
        %v1032 = vmax.f32 %v991, 0.0
        %v1033 = vmax.f32 %v993, 0.0
        %v1034 = vmax.f32 %v995, 0.0
        %v1035 = vmax.f32 %v999, 0.0
        %v1036 = vmax.f32 %v1001, 0.0
        %v1037 = vmax.f32 %v1003, 0.0
        %v1038 = vmax.f32 %v1005, 0.0
        %v1039 = vld [vmem:[%s5] sm:$0xf]
        %v1040 = vld [vmem:[%s5 + $0x4] sm:$0xf]
        %v1041 = vld [vmem:[%s5 + $0x8] sm:$0xf]
        %v1042 = vld [vmem:[%s5 + $0xc] sm:$0xf]
        %v1043 = vld [vmem:[%s5 + $0x10] sm:$0xf]
        %v1044 = vld [vmem:[%s5 + $0x14] sm:$0xf]
        %v1045 = vld [vmem:[%s5 + $0x18] sm:$0xf]
        %v1046 = vld [vmem:[%s5 + $0x1c] sm:$0xf]
        %v1047 = vld [vmem:[%s5 + $0x20] sm:$0xf]
        %v1048 = vld [vmem:[%s5 + $0x24] sm:$0xf]
        %v1049 = vld [vmem:[%s5 + $0x28] sm:$0xf]
        %v1050 = vld [vmem:[%s5 + $0x2c] sm:$0xf]
        %v1051 = vld [vmem:[%s5 + $0x30] sm:$0xf]
        %v1052 = vld [vmem:[%s5 + $0x34] sm:$0xf]
        %v1053 = vld [vmem:[%s5 + $0x38] sm:$0xf]
        %v1054 = vld [vmem:[%s5 + $0x3c] sm:$0xf]
        %v1055 = vpack.c.bf16 %v1009, %v1007
        %v1056 = vpack.c.bf16 %v1010, %v1008
        %v1057 = vpack.c.bf16 %v1013, %v1011
        %v1058 = vpack.c.bf16 %v1014, %v1012
        %v1059 = vpack.c.bf16 %v1017, %v1015
        %v1060 = vpack.c.bf16 %v1018, %v1016
        %v1061 = vpack.c.bf16 %v1021, %v1019
        %v1062 = vpack.c.bf16 %v1022, %v1020
        %v1063 = vpack.c.bf16 %v1025, %v1023
        %v1064 = vpack.c.bf16 %v1026, %v1024
        %v1065 = vpack.c.bf16 %v1029, %v1027
        %v1066 = vpack.c.bf16 %v1030, %v1028
        %v1067 = vpack.c.bf16 %v1033, %v1031
        %v1068 = vpack.c.bf16 %v1034, %v1032
        %v1069 = vpack.c.bf16 %v1037, %v1035
        %v1070 = vpack.c.bf16 %v1038, %v1036
        %v1071 = vld [vmem:[%s6] sm:$0xff]
        %v1072 = vld [vmem:[%s6 + $0x8] sm:$0xff]
        %v1073 = vld [vmem:[%s6 + $0x10] sm:$0xff]
        %v1074 = vld [vmem:[%s6 + $0x18] sm:$0xff]
        %v1075 = vld [vmem:[%s6 + $0x20] sm:$0xff]
        %v1076 = vld [vmem:[%s6 + $0x28] sm:$0xff]
        %v1077 = vld [vmem:[%s6 + $0x30] sm:$0xff]
        %v1078 = vld [vmem:[%s6 + $0x38] sm:$0xff]
        %v1079 = vld [vmem:[%s6 + $0x40] sm:$0xff]
        %v1080 = vld [vmem:[%s6 + $0x48] sm:$0xff]
        %v1081 = vld [vmem:[%s6 + $0x50] sm:$0xff]
        %v1082 = vld [vmem:[%s6 + $0x58] sm:$0xff]
        %v1083 = vld [vmem:[%s6 + $0x60] sm:$0xff]
        %v1084 = vld [vmem:[%s6 + $0x68] sm:$0xff]
        %v1085 = vld [vmem:[%s6 + $0x70] sm:$0xff]
        %v1086 = vld [vmem:[%s6 + $0x78] sm:$0xff]
        %1088 = vset.pattern.permute.xlu0 0
        %1089 = vperm.xlu0 %1088, %v1071
        %v1090 = vpop.permute.xlu0 %1089
        %1093 = vset.pattern.permute.xlu0 0
        %1094 = vperm.xlu0 %1093, %v1072
        %v1095 = vpop.permute.xlu0 %1094
        %1098 = vset.pattern.permute.xlu0 0
        %1099 = vperm.xlu0 %1098, %v1073
        %v1100 = vpop.permute.xlu0 %1099
        %1103 = vset.pattern.permute.xlu0 0
        %1104 = vperm.xlu0 %1103, %v1074
        %v1105 = vpop.permute.xlu0 %1104
        %1108 = vset.pattern.permute.xlu0 0
        %1109 = vperm.xlu0 %1108, %v1075
        %v1110 = vpop.permute.xlu0 %1109
        %1113 = vset.pattern.permute.xlu0 0
        %1114 = vperm.xlu0 %1113, %v1076
        %v1115 = vpop.permute.xlu0 %1114
        %1118 = vset.pattern.permute.xlu0 0
        %1119 = vperm.xlu0 %1118, %v1077
        %v1120 = vpop.permute.xlu0 %1119
        %1123 = vset.pattern.permute.xlu0 0
        %1124 = vperm.xlu0 %1123, %v1078
        %v1125 = vpop.permute.xlu0 %1124
        %1128 = vset.pattern.permute.xlu0 0
        %1129 = vperm.xlu0 %1128, %v1079
        %v1130 = vpop.permute.xlu0 %1129
        %1133 = vset.pattern.permute.xlu0 0
        %1134 = vperm.xlu0 %1133, %v1080
        %v1135 = vpop.permute.xlu0 %1134
        %1138 = vset.pattern.permute.xlu0 0
        %1139 = vperm.xlu0 %1138, %v1081
        %v1140 = vpop.permute.xlu0 %1139
        %1143 = vset.pattern.permute.xlu0 0
        %1144 = vperm.xlu0 %1143, %v1082
        %v1145 = vpop.permute.xlu0 %1144
        %1148 = vset.pattern.permute.xlu0 0
        %1149 = vperm.xlu0 %1148, %v1083
        %v1150 = vpop.permute.xlu0 %1149
        %1153 = vset.pattern.permute.xlu0 0
        %1154 = vperm.xlu0 %1153, %v1084
        %v1155 = vpop.permute.xlu0 %1154
        %1158 = vset.pattern.permute.xlu0 0
        %1159 = vperm.xlu0 %1158, %v1085
        %v1160 = vpop.permute.xlu0 %1159
        %1163 = vset.pattern.permute.xlu0 0
        %1164 = vperm.xlu0 %1163, %v1086
        %v1165 = vpop.permute.xlu0 %1164
        %v1183 = vunpack.c.l.b16 %v1039
        %v1184 = vunpack.c.l.b16 %v1040
        %v1185 = vunpack.c.l.b16 %v1041
        %v1186 = vunpack.c.l.b16 %v1042
        %v1187 = vunpack.c.l.b16 %v1043
        %v1188 = vunpack.c.l.b16 %v1044
        %v1189 = vunpack.c.l.b16 %v1045
        %v1190 = vunpack.c.l.b16 %v1046
        %v1191 = vunpack.c.l.b16 %v1047
        %v1192 = vunpack.c.l.b16 %v1048
        %v1193 = vunpack.c.l.b16 %v1049
        %v1194 = vunpack.c.l.b16 %v1050
        %v1195 = vunpack.c.l.b16 %v1051
        %v1196 = vunpack.c.l.b16 %v1052
        %v1197 = vunpack.c.l.b16 %v1053
        %v1198 = vunpack.c.l.b16 %v1054
        %v1199 = vpack.c.b16 %v1184, %v1183
        %v1200 = vpack.c.b16 %v1186, %v1185
        %v1201 = vpack.c.b16 %v1188, %v1187
        %v1202 = vpack.c.b16 %v1190, %v1189
        %v1203 = vpack.c.b16 %v1192, %v1191
        %v1204 = vpack.c.b16 %v1194, %v1193
        %v1205 = vpack.c.b16 %v1196, %v1195
        %v1206 = vpack.c.b16 %v1198, %v1197
        %1215 = vmatprep.subr.bf16.mxu0 %v1056
        %1216 = vmatpush1.bf16.msra.mxu0 %v1055
        %1217 = vmatprep.subr.bf16.mxu0 %v1058
        %1218 = vmatpush1.bf16.msra.mxu0 %v1057
        %1219 = vmatprep.subr.bf16.mxu0 %v1060
        %1220 = vmatpush1.bf16.msra.mxu0 %v1059
        %1221 = vmatprep.subr.bf16.mxu0 %v1062
        %1222 = vmatpush1.bf16.msra.mxu0 %v1061
        %1223 = vmatprep.subr.bf16.mxu0 %v1064
        %1224 = vmatpush1.bf16.msra.mxu0 %v1063
        %1225 = vmatprep.subr.bf16.mxu0 %v1066
        %1226 = vmatpush1.bf16.msra.mxu0 %v1065
        %1227 = vmatprep.subr.bf16.mxu0 %v1068
        %1228 = vmatpush1.bf16.msra.mxu0 %v1067
        %1229 = vmatprep.subr.bf16.mxu0 %v1070
        %1230 = vmatpush1.bf16.msra.mxu0 %v1069
        %1231 = vmatprep.subr.bf16.mxu0 0
        %1232 = vmatpush1.bf16.msra.mxu0 0
        %1233 = vmatprep.subr.bf16.mxu0 0
        %1234 = vmatpush1.bf16.msra.mxu0 0
        %1235 = vmatprep.subr.bf16.mxu0 0
        %1236 = vmatpush1.bf16.msra.mxu0 0
        %1237 = vmatprep.subr.bf16.mxu0 0
        %1238 = vmatpush1.bf16.msra.mxu0 0
        %1239 = vmatprep.subr.bf16.mxu0 0
        %1240 = vmatpush1.bf16.msra.mxu0 0
        %1241 = vmatprep.subr.bf16.mxu0 0
        %1242 = vmatpush1.bf16.msra.mxu0 0
        %1243 = vmatprep.subr.bf16.mxu0 0
        %1244 = vmatpush1.bf16.msra.mxu0 0
        %1245 = vmatprep.subr.bf16.mxu0 0
        %1246 = vmatpush1.bf16.msra.mxu0 0
        %1247 = vmatprep.mubr.bf16.mxu0 0
        %1248 = vmatmul.mubr.bf16.gmra.mrb[0].mxu0 %v1199
        %v1249 = vpop.f32.mrb[0].mxu0
        %v1250 = vadd.f32 %v1090, %v1249
        %v1251 = vpop.f32.mrb[0].mxu0
        %v1252 = vadd.f32 %v1090, %v1251
        %v1253 = vpop.f32.mrb[0].mxu0
        %v1254 = vadd.f32 %v1095, %v1253
        %v1255 = vpop.f32.mrb[0].mxu0
        %v1256 = vadd.f32 %v1095, %v1255
        %1257 = vmatprep.mubr.bf16.mxu0 0
        %1258 = vmatmul.mubr.bf16.gmra.mrb[0].mxu0 %v1200
        %v1259 = vpop.f32.mrb[0].mxu0
        %v1260 = vadd.f32 %v1100, %v1259
        %v1261 = vpop.f32.mrb[0].mxu0
        %v1262 = vadd.f32 %v1100, %v1261
        %v1263 = vpop.f32.mrb[0].mxu0
        %v1264 = vadd.f32 %v1105, %v1263
        %v1265 = vpop.f32.mrb[0].mxu0
        %v1266 = vadd.f32 %v1105, %v1265
        %1267 = vmatprep.mubr.bf16.mxu0 0
        %1268 = vmatmul.mubr.bf16.gmra.mrb[0].mxu0 %v1201
        %v1269 = vpop.f32.mrb[0].mxu0
        %v1270 = vadd.f32 %v1110, %v1269
        %v1271 = vpop.f32.mrb[0].mxu0
        %v1272 = vadd.f32 %v1110, %v1271
        %v1273 = vpop.f32.mrb[0].mxu0
        %v1274 = vadd.f32 %v1115, %v1273
        %v1275 = vpop.f32.mrb[0].mxu0
        %v1276 = vadd.f32 %v1115, %v1275
        %1277 = vmatprep.mubr.bf16.mxu0 0
        %1278 = vmatmul.mubr.bf16.gmra.mrb[0].mxu0 %v1202
        %v1279 = vpop.f32.mrb[0].mxu0
        %v1280 = vadd.f32 %v1120, %v1279
        %v1281 = vpop.f32.mrb[0].mxu0
        %v1282 = vadd.f32 %v1120, %v1281
        %v1283 = vpop.f32.mrb[0].mxu0
        %v1284 = vadd.f32 %v1125, %v1283
        %v1285 = vpop.f32.mrb[0].mxu0
        %v1286 = vadd.f32 %v1125, %v1285
        %1287 = vmatprep.mubr.bf16.mxu0 0
        %1288 = vmatmul.mubr.bf16.gmra.mrb[0].mxu0 %v1203
        %v1289 = vpop.f32.mrb[0].mxu0
        %v1290 = vadd.f32 %v1130, %v1289
        %v1291 = vpop.f32.mrb[0].mxu0
        %v1292 = vadd.f32 %v1130, %v1291
        %v1293 = vpop.f32.mrb[0].mxu0
        %v1294 = vadd.f32 %v1135, %v1293
        %v1295 = vpop.f32.mrb[0].mxu0
        %v1296 = vadd.f32 %v1135, %v1295
        %1297 = vmatprep.mubr.bf16.mxu0 0
        %1298 = vmatmul.mubr.bf16.gmra.mrb[0].mxu0 %v1204
        %v1299 = vpop.f32.mrb[0].mxu0
        %v1300 = vadd.f32 %v1140, %v1299
        %v1301 = vpop.f32.mrb[0].mxu0
        %v1302 = vadd.f32 %v1140, %v1301
        %v1303 = vpop.f32.mrb[0].mxu0
        %v1304 = vadd.f32 %v1145, %v1303
        %v1305 = vpop.f32.mrb[0].mxu0
        %v1306 = vadd.f32 %v1145, %v1305
        %1307 = vmatprep.mubr.bf16.mxu0 0
        %1308 = vmatmul.mubr.bf16.gmra.mrb[0].mxu0 %v1205
        %v1309 = vpop.f32.mrb[0].mxu0
        %v1310 = vadd.f32 %v1150, %v1309
        %v1311 = vpop.f32.mrb[0].mxu0
        %v1312 = vadd.f32 %v1150, %v1311
        %v1313 = vpop.f32.mrb[0].mxu0
        %v1314 = vadd.f32 %v1155, %v1313
        %v1315 = vpop.f32.mrb[0].mxu0
        %v1316 = vadd.f32 %v1155, %v1315
        %1317 = vmatprep.mubr.bf16.mxu0 0
        %1318 = vmatmul.mubr.bf16.gmra.mrb[0].mxu0 %v1206
        %v1319 = vpop.f32.mrb[0].mxu0
        %v1320 = vadd.f32 %v1160, %v1319
        %v1321 = vpop.f32.mrb[0].mxu0
        %v1322 = vadd.f32 %v1160, %v1321
        %v1323 = vpop.f32.mrb[0].mxu0
        %v1324 = vadd.f32 %v1165, %v1323
        %v1325 = vpop.f32.mrb[0].mxu0
        %v1326 = vadd.f32 %v1165, %v1325
        %1327 = vdwg.mxu0
        %1328 = vxpose.xlu0.b32.start [1/16] %v1250, 128
        %1329 = vxpose.xlu0.b32.cont [2/16] %v1254, 128
        %1330 = vxpose.xlu0.b32.cont [3/16] %v1260, 128
        %1331 = vxpose.xlu0.b32.cont [4/16] %v1264, 128
        %1332 = vxpose.xlu0.b32.cont [5/16] %v1270, 128
        %1333 = vxpose.xlu0.b32.cont [6/16] %v1274, 128
        %1334 = vxpose.xlu0.b32.cont [7/16] %v1280, 128
        %1335 = vxpose.xlu0.b32.cont [8/16] %v1284, 128
        %1336 = vxpose.xlu0.b32.cont [9/16] %v1290, 128
        %1337 = vxpose.xlu0.b32.cont [10/16] %v1294, 128
        %1338 = vxpose.xlu0.b32.cont [11/16] %v1300, 128
        %1339 = vxpose.xlu0.b32.cont [12/16] %v1304, 128
        %1340 = vxpose.xlu0.b32.cont [13/16] %v1310, 128
        %1341 = vxpose.xlu0.b32.cont [14/16] %v1314, 128
        %1342 = vxpose.xlu0.b32.cont [15/16] %v1320, 128
        %1343 = vxpose.xlu0.b32.end [16/16] %v1324, 128
        %v1344 = vpop.trf.xlu0
        %v1345 = vpop.trf.xlu0
        %v1346 = vpop.trf.xlu0
        %v1347 = vpop.trf.xlu0
        %v1348 = vpop.trf.xlu0
        %v1349 = vpop.trf.xlu0
        %v1350 = vpop.trf.xlu0
        %v1351 = vpop.trf.xlu0
        %v1352 = vpop.trf.xlu0
        %v1353 = vpop.trf.xlu0
        %v1354 = vpop.trf.xlu0
        %v1355 = vpop.trf.xlu0
        %v1356 = vpop.trf.xlu0
        %v1357 = vpop.trf.xlu0
        %v1358 = vpop.trf.xlu0
        %v1359 = vpop.trf.xlu0
        %1360 = vxpose.xlu0.b32.start [1/16] %v1252, 128
        %1361 = vxpose.xlu0.b32.cont [2/16] %v1256, 128
        %1362 = vxpose.xlu0.b32.cont [3/16] %v1262, 128
        %1363 = vxpose.xlu0.b32.cont [4/16] %v1266, 128
        %1364 = vxpose.xlu0.b32.cont [5/16] %v1272, 128
        %1365 = vxpose.xlu0.b32.cont [6/16] %v1276, 128
        %1366 = vxpose.xlu0.b32.cont [7/16] %v1282, 128
        %1367 = vxpose.xlu0.b32.cont [8/16] %v1286, 128
        %1368 = vxpose.xlu0.b32.cont [9/16] %v1292, 128
        %1369 = vxpose.xlu0.b32.cont [10/16] %v1296, 128
        %1370 = vxpose.xlu0.b32.cont [11/16] %v1302, 128
        %1371 = vxpose.xlu0.b32.cont [12/16] %v1306, 128
        %1372 = vxpose.xlu0.b32.cont [13/16] %v1312, 128
        %1373 = vxpose.xlu0.b32.cont [14/16] %v1316, 128
        %1374 = vxpose.xlu0.b32.cont [15/16] %v1322, 128
        %1375 = vxpose.xlu0.b32.end [16/16] %v1326, 128
        %v1376 = vpop.trf.xlu0
        %v1377 = vpop.trf.xlu0
        %v1378 = vpop.trf.xlu0
        %v1379 = vpop.trf.xlu0
        %v1380 = vpop.trf.xlu0
        %v1381 = vpop.trf.xlu0
        %v1382 = vpop.trf.xlu0
        %v1383 = vpop.trf.xlu0
        %v1384 = vpop.trf.xlu0
        %v1385 = vpop.trf.xlu0
        %v1386 = vpop.trf.xlu0
        %v1387 = vpop.trf.xlu0
        %v1388 = vpop.trf.xlu0
        %v1389 = vpop.trf.xlu0
        %v1390 = vpop.trf.xlu0
        %v1391 = vpop.trf.xlu0
        %1392 = vst [vmem:[%s274] sm:$0xff] %v1344
        %1393 = vst [vmem:[%s274 + $0x8] sm:$0xff] %v1345
        %1394 = vst [vmem:[%s274 + $0x10] sm:$0xff] %v1346
        %1395 = vst [vmem:[%s274 + $0x18] sm:$0xff] %v1347
        %1396 = vst [vmem:[%s274 + $0x20] sm:$0xff] %v1348
        %1397 = vst [vmem:[%s274 + $0x28] sm:$0xff] %v1349
        %1398 = vst [vmem:[%s274 + $0x30] sm:$0xff] %v1350
        %1399 = vst [vmem:[%s274 + $0x38] sm:$0xff] %v1351
        %1400 = vst [vmem:[%s274 + $0x40] sm:$0xff] %v1352
        %1401 = vst [vmem:[%s274 + $0x48] sm:$0xff] %v1353
        %1402 = vst [vmem:[%s274 + $0x50] sm:$0xff] %v1354
        %1403 = vst [vmem:[%s274 + $0x58] sm:$0xff] %v1355
        %1404 = vst [vmem:[%s274 + $0x60] sm:$0xff] %v1356
        %1405 = vst [vmem:[%s274 + $0x68] sm:$0xff] %v1357
        %1406 = vst [vmem:[%s274 + $0x70] sm:$0xff] %v1358
        %1407 = vst [vmem:[%s274 + $0x78] sm:$0xff] %v1359
        %s1408 = scalar_lea.vmem %s274, 128 [#allocation2]
        %1409 = vst [vmem:[%s1408] sm:$0xff] %v1376
        %1410 = vst [vmem:[%s1408 + $0x8] sm:$0xff] %v1377
        %1411 = vst [vmem:[%s1408 + $0x10] sm:$0xff] %v1378
        %1412 = vst [vmem:[%s1408 + $0x18] sm:$0xff] %v1379
        %1413 = vst [vmem:[%s1408 + $0x20] sm:$0xff] %v1380
        %1414 = vst [vmem:[%s1408 + $0x28] sm:$0xff] %v1381
        %1415 = vst [vmem:[%s1408 + $0x30] sm:$0xff] %v1382
        %1416 = vst [vmem:[%s1408 + $0x38] sm:$0xff] %v1383
        %1417 = vst [vmem:[%s1408 + $0x40] sm:$0xff] %v1384
        %1418 = vst [vmem:[%s1408 + $0x48] sm:$0xff] %v1385
        %1419 = vst [vmem:[%s1408 + $0x50] sm:$0xff] %v1386
        %1420 = vst [vmem:[%s1408 + $0x58] sm:$0xff] %v1387
        %1421 = vst [vmem:[%s1408 + $0x60] sm:$0xff] %v1388
        %1422 = vst [vmem:[%s1408 + $0x68] sm:$0xff] %v1389
        %1423 = vst [vmem:[%s1408 + $0x70] sm:$0xff] %v1390
        %1424 = vst [vmem:[%s1408 + $0x78] sm:$0xff] %v1391
        %s1425 = sand.u32 %s181, 1
        %s1426 = scalar_lea.sflag [#allocation3], %s1425
        %s1427 = sand.u32 %s181, 1
        %s1428 = smul.addr %s1427, 256
        %s1429 = scalar_lea.vmem [#allocation2], %s1428
        // Predicated region
        $region49: #{_forward_scores.1} parent=47 // pred_check
          %p1430 = pneg %p191
        $region50: #{_forward_scores.1} parent=47 // pred_check_branch
          %1432 = sbr.rel (%p1430) target = $region52
        $region51: #{_forward_scores.1} parent=47 // pred_region
          %s1433 = smul.u32 2, %s21
          %s1435 = ssub.s32 4096, 4096
          %1436 = vsyncadd %s1426, %s1435
          %s1437 = smul.addr %s1433, 16
          %s1438 = smul.addr %s1437, 128
          %s1439 = scalar_lea.hbm %s7, %s1438
          %s1440 = sshll.u32 %s1429, 4
          %s1441 = int_to_ptr.vmem [resolvable:$true] %s1440
          %1446 = dma.vmem_to_hbm [thread:$0]  %s1441, 4096, %s1439, %s1426, 128, 128, 8
        $region52: #{_forward_scores.1} parent=47 // pred_fallthru
          _
      $region48: #{_forward_scores.1} parent=5 // pred_fallthru
        _
      %p1447 = scmp.le.s32.totalorder 2, %s16
      // Predicated region
      $region53: #{_forward_scores.1} parent=5 // pred_check
        %p1448 = pneg %p1447
      $region54: #{_forward_scores.1} parent=5 // pred_check_branch
        %1450 = sbr.rel (%p1448) target = $region56
      $region55: #{_forward_scores.1} parent=5 // pred_region
        %s1451 = ssub.s32 %s16, 2
        // Predicated region
        $region57: #{_forward_scores.1} parent=55 // pred_check
          %p1452 = pneg %p197
        $region58: #{_forward_scores.1} parent=55 // pred_check_branch
          %1454 = sbr.rel (%p1452) target = $region60
        $region59: #{_forward_scores.1} parent=55 // pred_region
          %s1455 = sand.u32 %s182, 1
          %s1456 = scalar_lea.sflag [#allocation3], %s1455
          %s1457 = sand.u32 %s182, 1
          %s1458 = smul.addr %s1457, 256
          %s1459 = scalar_lea.vmem [#allocation2], %s1458
          %1460 = dma.done %s1456, 4096
        $region60: #{_forward_scores.1} parent=55 // pred_fallthru
          _
      $region56: #{_forward_scores.1} parent=5 // pred_fallthru
        _
    $region6: #{_forward_scores.1} parent=1 // loop_footer
      %s20 = sadd.s32 1, %s16
    $region7: #{_forward_scores.1} parent=1 // loop_footer_branch
      %15 = sbr.rel target = $region3
    $region8: #{_forward_scores.1} parent=1 // loop_exit
      _
    %1461 = vsyncpa [#allocation3], 1
    %s1462 = scalar_lea.sflag [#allocation3], 1
    %1463 = vsyncpa %s1462, 1

</llo_original>
